<compile_context>
chip_gen: v5e
topology: v5e:2x2
jax: 0.10.0
libtpu: 0.0.40
codegen_flags: <defaults>
</compile_context>

<pallas_src>
import functools
import itertools
import math

import jax
import jax.numpy as jnp
from jax.experimental import pallas as pl
from jax.experimental.pallas import tpu as pltpu

# ---------------- config ----------------
DECO_KERNELS = 8        # deco_args.deco_kernels (inplanes)
N_LAYERS = 1            # deco_args.n_layers
OUTPUT_CHANNELS = 3     # deco_args.output_channels
DECO_WEIGHT = 0.001     # deco_args.deco_weight
IMAGE_WEIGHT = 1.0      # module-level image_weight
USE_TANH = False        # deco_args.use_tanh
BN_EPS = 1e-5


# ---------------- fused kernel ----------------
def _deco_kernel(xq_ref, x_ref, w1_ref, b1_ref, sel_ref, ms_ref,
                 wb1_ref, bb1_ref, wb2_ref, bb2_ref, mb_ref,
                 wo_ref, bo_ref, uh_ref, uw_ref,
                 o_ref,
                 tap_s, pool_scr, blk_scr, blk2_scr, tap_b, z3_scr,
                 *, oh, ow, ph, pw, n_layers, use_tanh, image_weight):
    C = w1_ref.shape[0]                 # deco kernels (8)
    cin = xq_ref.shape[2]               # 3
    cout = wo_ref.shape[0]              # 3
    wr_s = ow + 2                       # stem raster width (= padded W // 2)
    s_stem = (oh - 1) * wr_s + ow       # stem raster length (2 garbage cols/row)
    wr_b = pw + 2                       # block raster width
    s_blk = (ph - 1) * wr_b + pw

    # ---- stem: conv1 5x5/s2 (BN scale folded into weights) + bias + ReLU ----
    # im2col into VMEM from contiguous slices of the phase-decomposed padded
    # input, then a single [C, 75] x [75, S] matmul.
    for t, (di, dj) in enumerate(itertools.product(range(5), range(5))):
        pidx = (di % 2) * 2 + (dj % 2)
        base = (di // 2) * wr_s + (dj // 2)
        tap_s[cin * t:cin * t + cin, :] = xq_ref[0, pidx, :, base:base + s_stem]
    conv = jnp.dot(w1_ref[...], tap_s[...], preferred_element_type=jnp.float32)
    conv = jnp.maximum(conv + b1_ref[...], 0.0)              # [C, s_stem]

    # ---- maxpool 3x3/s2/p1 (zero padding == -inf padding post-ReLU) ----
    pool_scr[...] = jnp.zeros(pool_scr.shape, jnp.float32)
    pool_scr[:, wr_s + 1:wr_s + 1 + s_stem] = conv * ms_ref[...]
    blk_scr[...] = jnp.zeros(blk_scr.shape, jnp.float32)
    for py in range(ph):
        r0 = 2 * py
        vrow = jnp.maximum(
            jnp.maximum(pool_scr[:, r0 * wr_s:(r0 + 1) * wr_s],
                        pool_scr[:, (r0 + 1) * wr_s:(r0 + 2) * wr_s]),
            pool_scr[:, (r0 + 2) * wr_s:(r0 + 3) * wr_s])     # [C, ow+2]
        hd = jnp.maximum(jnp.maximum(vrow[:, 0:ow], vrow[:, 1:ow + 1]),
                         vrow[:, 2:ow + 2])                   # [C, ow]
        prow = jnp.dot(hd, sel_ref[...],
                       preferred_element_type=jnp.float32)    # [C, pw]
        off = (py + 1) * wr_b + 1
        blk_scr[:, off:off + pw] = prow                       # zero-padded feature

    # ---- layer1: BasicBlocks (conv3x3+BN+ReLU, conv3x3+BN, +id, ReLU) ----
    mb = mb_ref[...]                                          # [1, s_blk]
    out_blk = blk_scr[:, wr_b + 1:wr_b + 1 + s_blk]           # pooled features
    for l in range(n_layers):
        resid = blk_scr[:, wr_b + 1:wr_b + 1 + s_blk]         # identity (resident)
        for t, (di, dj) in enumerate(itertools.product(range(3), range(3))):
            base = di * wr_b + dj
            tap_b[C * t:C * t + C, :] = blk_scr[:, base:base + s_blk]
        h = jnp.dot(wb1_ref[l], tap_b[...], preferred_element_type=jnp.float32)
        h = jnp.maximum(h + bb1_ref[l], 0.0)
        blk2_scr[...] = jnp.zeros(blk2_scr.shape, jnp.float32)
        blk2_scr[:, wr_b + 1:wr_b + 1 + s_blk] = h * mb       # re-zero the halo
        for t, (di, dj) in enumerate(itertools.product(range(3), range(3))):
            base = di * wr_b + dj
            tap_b[C * t:C * t + C, :] = blk2_scr[:, base:base + s_blk]
        h2 = jnp.dot(wb2_ref[l], tap_b[...], preferred_element_type=jnp.float32)
        out_blk = jnp.maximum(h2 + bb2_ref[l] + resid, 0.0)   # [C, s_blk]
        if l + 1 < n_layers:
            blk_scr[:, wr_b + 1:wr_b + 1 + s_blk] = out_blk * mb

    # ---- tail: conv_out 1x1 + separable bilinear x4 + weighted_sum ----
    z = jnp.dot(wo_ref[...], out_blk,
                preferred_element_type=jnp.float32) + bo_ref[...]  # [cout, s_blk]
    for i in range(ph):                                       # raster -> [c, ph, pw]
        z3_scr[:, i, :] = z[:, i * wr_b:i * wr_b + pw]
    uh = uh_ref[...]                      # [H, ph]   (deco_weight folded in)
    uw = uw_ref[...]                      # [pw, W]
    for co in range(cout):
        t1 = jnp.dot(uh, z3_scr[co], preferred_element_type=jnp.float32)  # [H, pw]
        up = jnp.dot(t1, uw, preferred_element_type=jnp.float32)          # [H, W]
        res = up + image_weight * x_ref[0, co]
        if use_tanh:
            res = jnp.tanh(res)
        o_ref[0, co] = res


# ---------------- host-side helpers (setup only) ----------------
def _bilinear_matrix(in_size, scale):
    """[in_size*scale, in_size] bilinear matrix, align_corners=False."""
    out_size = in_size * scale
    o = jnp.arange(out_size, dtype=jnp.float32)
    src = jnp.maximum((o + 0.5) / scale - 0.5, 0.0)
    i0 = jnp.minimum(jnp.floor(src).astype(jnp.int32), in_size - 1)
    lam = src - i0.astype(jnp.float32)
    i1 = jnp.minimum(i0 + 1, in_size - 1)
    rows = jnp.arange(out_size)
    U = jnp.zeros((out_size, in_size), jnp.float32)
    U = U.at[rows, i0].add(1.0 - lam)
    U = U.at[rows, i1].add(lam)
    return U


def init_params(key):
    bn_scale = 1.0 / math.sqrt(1.0 + BN_EPS)   # eval-mode BN, identity stats

    def conv_w(k, co, ci, kh, kw):
        # init_weights: normal(0, sqrt(2 / (kh*kw*out_channels)))
        std = math.sqrt(2.0 / (kh * kw * co))
        return std * jax.random.normal(k, (co, ci, kh, kw), dtype=jnp.float32)

    def fold(w):
        # [co, ci, kh, kw] -> [co, kh*kw*ci] (tap-major, channel-minor), with
        # the eval-mode BN scale folded into the weights.
        co, ci, kh, kw = w.shape
        return jnp.transpose(w, (0, 2, 3, 1)).reshape(co, kh * kw * ci) * bn_scale

    C = DECO_KERNELS
    k1, k2, k3, k4 = jax.random.split(key, 4)
    bk = jax.random.split(k3, 2 * N_LAYERS)
    params = {
        "w1": fold(conv_w(k1, C, 3, 5, 5)),                     # [C, 75]
        "b1": jnp.zeros((C, 1), jnp.float32),                   # folded BN bias
        "wb1": jnp.stack([fold(conv_w(bk[2 * l], C, C, 3, 3))
                          for l in range(N_LAYERS)]),           # [L, C, 72]
        "wb2": jnp.stack([fold(conv_w(bk[2 * l + 1], C, C, 3, 3))
                          for l in range(N_LAYERS)]),           # [L, C, 72]
        "bb1": jnp.zeros((N_LAYERS, C, 1), jnp.float32),
        "bb2": jnp.zeros((N_LAYERS, C, 1), jnp.float32),
        "wout": conv_w(k2, OUTPUT_CHANNELS, C, 1, 1)[:, :, 0, 0],  # [3, C]
        # PyTorch Conv2d default bias init: U(-1/sqrt(fan_in), 1/sqrt(fan_in))
        "bout": jax.random.uniform(k4, (OUTPUT_CHANNELS, 1), jnp.float32,
                                   -1.0 / math.sqrt(C), 1.0 / math.sqrt(C)),
    }
    return params


# ---------------- forward ----------------
def deco_forward(params, x_nchw):
    x = x_nchw.astype(jnp.float32)
    N, CIN, H, W = x.shape
    assert CIN == 3 and H % 4 == 0 and W % 4 == 0
    C = DECO_KERNELS
    oh, ow = H // 2, W // 2                   # after conv1 (stride 2)
    ph, pw = oh // 2, ow // 2                 # after maxpool (stride 2)
    hp2, wp2 = (H + 4) // 2, (W + 4) // 2     # phase-plane dims; wp2 == ow + 2
    pph = hp2 * wp2
    wr_s, wr_b = ow + 2, pw + 2
    s_stem = (oh - 1) * wr_s + ow
    s_blk = (ph - 1) * wr_b + pw

    # Phase-decomposed padded input (pure layout plumbing, done once in XLA):
    # xq[n, 2*p+q, c, i*wp2 + j] == pad(x)[n, c, 2*i+p, 2*j+q]
    xp = jnp.pad(x, ((0, 0), (0, 0), (2, 2), (2, 2)))
    xq = xp.reshape(N, CIN, hp2, 2, wp2, 2).transpose(0, 3, 5, 1, 2, 4)
    xq = xq.reshape(N, 4, CIN, pph)

    # Small constants: stride-2 column-selection matrix, garbage-column masks,
    # separable bilinear matrices (deco_weight folded into Uh).
    sel = (jnp.arange(ow)[:, None] == 2 * jnp.arange(pw)[None, :]
           ).astype(jnp.float32)                                     # [ow, pw]
    mask_s = (jnp.arange(s_stem)[None, :] % wr_s < ow).astype(jnp.float32)
    mask_b = (jnp.arange(s_blk)[None, :] % wr_b < pw).astype(jnp.float32)
    uh = _bilinear_matrix(ph, 4) * DECO_WEIGHT                       # [H, ph]
    uw = jnp.transpose(_bilinear_matrix(pw, 4))                      # [pw, W]

    kernel = functools.partial(
        _deco_kernel, oh=oh, ow=ow, ph=ph, pw=pw, n_layers=N_LAYERS,
        use_tanh=USE_TANH, image_weight=IMAGE_WEIGHT)

    return pl.pallas_call(
        kernel,
        out_shape=jax.ShapeDtypeStruct((N, OUTPUT_CHANNELS, H, W), jnp.float32),
        grid=(N,),
        in_specs=[
            pl.BlockSpec((1, 4, CIN, pph), lambda n: (n, 0, 0, 0)),     # phase planes
            pl.BlockSpec((1, CIN, H, W), lambda n: (n, 0, 0, 0)),       # residual image
            pl.BlockSpec((C, 75), lambda n: (0, 0)),                    # conv1 w (BN folded)
            pl.BlockSpec((C, 1), lambda n: (0, 0)),                     # conv1/bn1 bias
            pl.BlockSpec((ow, pw), lambda n: (0, 0)),                   # pool col selection
            pl.BlockSpec((1, s_stem), lambda n: (0, 0)),                # stem raster mask
            pl.BlockSpec((N_LAYERS, C, 9 * C), lambda n: (0, 0, 0)),    # block conv1 w
            pl.BlockSpec((N_LAYERS, C, 1), lambda n: (0, 0, 0)),        # block bn1 bias
            pl.BlockSpec((N_LAYERS, C, 9 * C), lambda n: (0, 0, 0)),    # block conv2 w
            pl.BlockSpec((N_LAYERS, C, 1), lambda n: (0, 0, 0)),        # block bn2 bias
            pl.BlockSpec((1, s_blk), lambda n: (0, 0)),                 # block raster mask
            pl.BlockSpec((OUTPUT_CHANNELS, C), lambda n: (0, 0)),       # conv_out w
            pl.BlockSpec((OUTPUT_CHANNELS, 1), lambda n: (0, 0)),       # conv_out bias
            pl.BlockSpec((H, ph), lambda n: (0, 0)),                    # Uh * deco_weight
            pl.BlockSpec((pw, W), lambda n: (0, 0)),                    # Uw^T
        ],
        out_specs=pl.BlockSpec((1, OUTPUT_CHANNELS, H, W),
                               lambda n: (n, 0, 0, 0)),
        scratch_shapes=[
            pltpu.VMEM((25 * CIN, s_stem), jnp.float32),        # stem im2col taps
            pltpu.VMEM((C, (oh + 2) * wr_s), jnp.float32),      # padded pool input
            pltpu.VMEM((C, (ph + 2) * wr_b), jnp.float32),      # padded block feature
            pltpu.VMEM((C, (ph + 2) * wr_b), jnp.float32),      # padded block intermediate
            pltpu.VMEM((9 * C, s_blk), jnp.float32),            # block im2col taps
            pltpu.VMEM((OUTPUT_CHANNELS, ph, pw), jnp.float32), # conv_out as [c, ph, pw]
        ],
        compiler_params=pltpu.CompilerParams(
            dimension_semantics=("parallel",)),
    )(xq, x, params["w1"], params["b1"], sel, mask_s,
      params["wb1"], params["bb1"], params["wb2"], params["bb2"], mask_b,
      params["wout"], params["bout"], uh, uw)


if __name__ == "__main__":
    key = jax.random.PRNGKey(0)
    pkey, xkey = jax.random.split(key)
    params = init_params(pkey)
    x = jax.random.normal(xkey, (2, 3, 16, 16), dtype=jnp.float32)  # NCHW

    out = jax.jit(deco_forward)(params, x)
    jax.block_until_ready(out)
    assert out.shape == (2, 3, 16, 16), out.shape
    assert bool(jnp.all(jnp.isfinite(out)))
    print("KERNEL_OK")
</pallas_src>

<mosaic_0001>
module attributes {stable_mosaic.version = 11 : i64} {
  func.func @_deco_kernel(%arg0: i32, %arg1: memref<1x4x3x100xf32, #tpu.memory_space<vmem>>, %arg2: memref<1x3x16x16xf32, #tpu.memory_space<vmem>>, %arg3: memref<8x75xf32, #tpu.memory_space<vmem>>, %arg4: memref<8x1xf32, #tpu.memory_space<vmem>>, %arg5: memref<8x4xf32, #tpu.memory_space<vmem>>, %arg6: memref<1x78xf32, #tpu.memory_space<vmem>>, %arg7: memref<1x8x72xf32, #tpu.memory_space<vmem>>, %arg8: memref<1x8x1xf32, #tpu.memory_space<vmem>>, %arg9: memref<1x8x72xf32, #tpu.memory_space<vmem>>, %arg10: memref<1x8x1xf32, #tpu.memory_space<vmem>>, %arg11: memref<1x22xf32, #tpu.memory_space<vmem>>, %arg12: memref<3x8xf32, #tpu.memory_space<vmem>>, %arg13: memref<3x1xf32, #tpu.memory_space<vmem>>, %arg14: memref<16x4xf32, #tpu.memory_space<vmem>>, %arg15: memref<4x16xf32, #tpu.memory_space<vmem>>, %arg16: memref<1x3x16x16xf32, #tpu.memory_space<vmem>>, %arg17: memref<75x78xf32, #tpu.memory_space<vmem>>, %arg18: memref<8x100xf32, #tpu.memory_space<vmem>>, %arg19: memref<8x36xf32, #tpu.memory_space<vmem>>, %arg20: memref<8x36xf32, #tpu.memory_space<vmem>>, %arg21: memref<72x22xf32, #tpu.memory_space<vmem>>, %arg22: memref<3x4x4xf32, #tpu.memory_space<vmem>>) attributes {dimension_semantics = [#tpu.dimension_semantics<parallel>], iteration_bounds = array<i64: 2>, scalar_prefetch = 0 : i64, scratch_operands = 6 : i64, tpu.core_type = #tpu.core_type<tc>, window_params = [{transform_indices = @transform_0, window_bounds = array<i64: 1, 4, 3, 100>}, {transform_indices = @transform_1, window_bounds = array<i64: 1, 3, 16, 16>}, {pipeline_mode = #tpu.pipeline_mode<synchronous>, transform_indices = @transform_2, window_bounds = array<i64: 8, 75>}, {pipeline_mode = #tpu.pipeline_mode<synchronous>, transform_indices = @transform_3, window_bounds = array<i64: 8, 1>}, {pipeline_mode = #tpu.pipeline_mode<synchronous>, transform_indices = @transform_4, window_bounds = array<i64: 8, 4>}, {pipeline_mode = #tpu.pipeline_mode<synchronous>, transform_indices = @transform_5, window_bounds = array<i64: 1, 78>}, {pipeline_mode = #tpu.pipeline_mode<synchronous>, transform_indices = @transform_6, window_bounds = array<i64: 1, 8, 72>}, {pipeline_mode = #tpu.pipeline_mode<synchronous>, transform_indices = @transform_7, window_bounds = array<i64: 1, 8, 1>}, {pipeline_mode = #tpu.pipeline_mode<synchronous>, transform_indices = @transform_8, window_bounds = array<i64: 1, 8, 72>}, {pipeline_mode = #tpu.pipeline_mode<synchronous>, transform_indices = @transform_9, window_bounds = array<i64: 1, 8, 1>}, {pipeline_mode = #tpu.pipeline_mode<synchronous>, transform_indices = @transform_10, window_bounds = array<i64: 1, 22>}, {pipeline_mode = #tpu.pipeline_mode<synchronous>, transform_indices = @transform_11, window_bounds = array<i64: 3, 8>}, {pipeline_mode = #tpu.pipeline_mode<synchronous>, transform_indices = @transform_12, window_bounds = array<i64: 3, 1>}, {pipeline_mode = #tpu.pipeline_mode<synchronous>, transform_indices = @transform_13, window_bounds = array<i64: 16, 4>}, {pipeline_mode = #tpu.pipeline_mode<synchronous>, transform_indices = @transform_14, window_bounds = array<i64: 4, 16>}, {transform_indices = @transform_15, window_bounds = array<i64: 1, 3, 16, 16>}]} {
    %c0 = arith.constant 0 : index
    %c0_0 = arith.constant 0 : index
    %c0_1 = arith.constant 0 : index
    %c0_2 = arith.constant 0 : index
    %0 = vector.load %arg1[%c0, %c0_0, %c0_1, %c0_2] : memref<1x4x3x100xf32, #tpu.memory_space<vmem>>, vector<1x1x3x78xf32>
    %1 = vector.shape_cast %0 : vector<1x1x3x78xf32> to vector<3x78xf32>
    %c0_3 = arith.constant 0 : index
    %c0_4 = arith.constant 0 : index
    %2 = vector.load %arg17[%c0_3, %c0_4] : memref<75x78xf32, #tpu.memory_space<vmem>>, vector<3x78xf32>
    tpu.vector_store %arg17[%c0_3, %c0_4], %1 {strides = array<i32>} : memref<75x78xf32, #tpu.memory_space<vmem>>, vector<3x78xf32>,
    %c0_5 = arith.constant 0 : index
    %c1 = arith.constant 1 : index
    %c0_6 = arith.constant 0 : index
    %c0_7 = arith.constant 0 : index
    %3 = vector.load %arg1[%c0_5, %c1, %c0_6, %c0_7] : memref<1x4x3x100xf32, #tpu.memory_space<vmem>>, vector<1x1x3x78xf32>
    %4 = vector.shape_cast %3 : vector<1x1x3x78xf32> to vector<3x78xf32>
    %c3 = arith.constant 3 : index
    %c0_8 = arith.constant 0 : index
    %5 = vector.load %arg17[%c3, %c0_8] : memref<75x78xf32, #tpu.memory_space<vmem>>, vector<3x78xf32>
    tpu.vector_store %arg17[%c3, %c0_8], %4 {strides = array<i32>} : memref<75x78xf32, #tpu.memory_space<vmem>>, vector<3x78xf32>,
    %c0_9 = arith.constant 0 : index
    %c0_10 = arith.constant 0 : index
    %c0_11 = arith.constant 0 : index
    %c1_12 = arith.constant 1 : index
    %6 = vector.load %arg1[%c0_9, %c0_10, %c0_11, %c1_12] : memref<1x4x3x100xf32, #tpu.memory_space<vmem>>, vector<1x1x3x78xf32>
    %7 = vector.shape_cast %6 : vector<1x1x3x78xf32> to vector<3x78xf32>
    %c6 = arith.constant 6 : index
    %c0_13 = arith.constant 0 : index
    %8 = vector.load %arg17[%c6, %c0_13] : memref<75x78xf32, #tpu.memory_space<vmem>>, vector<3x78xf32>
    tpu.vector_store %arg17[%c6, %c0_13], %7 {strides = array<i32>} : memref<75x78xf32, #tpu.memory_space<vmem>>, vector<3x78xf32>,
    %c0_14 = arith.constant 0 : index
    %c1_15 = arith.constant 1 : index
    %c0_16 = arith.constant 0 : index
    %c1_17 = arith.constant 1 : index
    %9 = vector.load %arg1[%c0_14, %c1_15, %c0_16, %c1_17] : memref<1x4x3x100xf32, #tpu.memory_space<vmem>>, vector<1x1x3x78xf32>
    %10 = vector.shape_cast %9 : vector<1x1x3x78xf32> to vector<3x78xf32>
    %c9 = arith.constant 9 : index
    %c0_18 = arith.constant 0 : index
    %11 = vector.load %arg17[%c9, %c0_18] : memref<75x78xf32, #tpu.memory_space<vmem>>, vector<3x78xf32>
    tpu.vector_store %arg17[%c9, %c0_18], %10 {strides = array<i32>} : memref<75x78xf32, #tpu.memory_space<vmem>>, vector<3x78xf32>,
    %c0_19 = arith.constant 0 : index
    %c0_20 = arith.constant 0 : index
    %c0_21 = arith.constant 0 : index
    %c2 = arith.constant 2 : index
    %12 = vector.load %arg1[%c0_19, %c0_20, %c0_21, %c2] : memref<1x4x3x100xf32, #tpu.memory_space<vmem>>, vector<1x1x3x78xf32>
    %13 = vector.shape_cast %12 : vector<1x1x3x78xf32> to vector<3x78xf32>
    %c12 = arith.constant 12 : index
    %c0_22 = arith.constant 0 : index
    %14 = vector.load %arg17[%c12, %c0_22] : memref<75x78xf32, #tpu.memory_space<vmem>>, vector<3x78xf32>
    tpu.vector_store %arg17[%c12, %c0_22], %13 {strides = array<i32>} : memref<75x78xf32, #tpu.memory_space<vmem>>, vector<3x78xf32>,
    %c0_23 = arith.constant 0 : index
    %c2_24 = arith.constant 2 : index
    %c0_25 = arith.constant 0 : index
    %c0_26 = arith.constant 0 : index
    %15 = vector.load %arg1[%c0_23, %c2_24, %c0_25, %c0_26] : memref<1x4x3x100xf32, #tpu.memory_space<vmem>>, vector<1x1x3x78xf32>
    %16 = vector.shape_cast %15 : vector<1x1x3x78xf32> to vector<3x78xf32>
    %c15 = arith.constant 15 : index
    %c0_27 = arith.constant 0 : index
    %17 = vector.load %arg17[%c15, %c0_27] : memref<75x78xf32, #tpu.memory_space<vmem>>, vector<3x78xf32>
    tpu.vector_store %arg17[%c15, %c0_27], %16 {strides = array<i32>} : memref<75x78xf32, #tpu.memory_space<vmem>>, vector<3x78xf32>,
    %c0_28 = arith.constant 0 : index
    %c3_29 = arith.constant 3 : index
    %c0_30 = arith.constant 0 : index
    %c0_31 = arith.constant 0 : index
    %18 = vector.load %arg1[%c0_28, %c3_29, %c0_30, %c0_31] : memref<1x4x3x100xf32, #tpu.memory_space<vmem>>, vector<1x1x3x78xf32>
    %19 = vector.shape_cast %18 : vector<1x1x3x78xf32> to vector<3x78xf32>
    %c18 = arith.constant 18 : index
    %c0_32 = arith.constant 0 : index
    %20 = vector.load %arg17[%c18, %c0_32] : memref<75x78xf32, #tpu.memory_space<vmem>>, vector<3x78xf32>
    tpu.vector_store %arg17[%c18, %c0_32], %19 {strides = array<i32>} : memref<75x78xf32, #tpu.memory_space<vmem>>, vector<3x78xf32>,
    %c0_33 = arith.constant 0 : index
    %c2_34 = arith.constant 2 : index
    %c0_35 = arith.constant 0 : index
    %c1_36 = arith.constant 1 : index
    %21 = vector.load %arg1[%c0_33, %c2_34, %c0_35, %c1_36] : memref<1x4x3x100xf32, #tpu.memory_space<vmem>>, vector<1x1x3x78xf32>
    %22 = vector.shape_cast %21 : vector<1x1x3x78xf32> to vector<3x78xf32>
    %c21 = arith.constant 21 : index
    %c0_37 = arith.constant 0 : index
    %23 = vector.load %arg17[%c21, %c0_37] : memref<75x78xf32, #tpu.memory_space<vmem>>, vector<3x78xf32>
    tpu.vector_store %arg17[%c21, %c0_37], %22 {strides = array<i32>} : memref<75x78xf32, #tpu.memory_space<vmem>>, vector<3x78xf32>,
    %c0_38 = arith.constant 0 : index
    %c3_39 = arith.constant 3 : index
    %c0_40 = arith.constant 0 : index
    %c1_41 = arith.constant 1 : index
    %24 = vector.load %arg1[%c0_38, %c3_39, %c0_40, %c1_41] : memref<1x4x3x100xf32, #tpu.memory_space<vmem>>, vector<1x1x3x78xf32>
    %25 = vector.shape_cast %24 : vector<1x1x3x78xf32> to vector<3x78xf32>
    %c24 = arith.constant 24 : index
    %c0_42 = arith.constant 0 : index
    %26 = vector.load %arg17[%c24, %c0_42] : memref<75x78xf32, #tpu.memory_space<vmem>>, vector<3x78xf32>
    tpu.vector_store %arg17[%c24, %c0_42], %25 {strides = array<i32>} : memref<75x78xf32, #tpu.memory_space<vmem>>, vector<3x78xf32>,
    %c0_43 = arith.constant 0 : index
    %c2_44 = arith.constant 2 : index
    %c0_45 = arith.constant 0 : index
    %c2_46 = arith.constant 2 : index
    %27 = vector.load %arg1[%c0_43, %c2_44, %c0_45, %c2_46] : memref<1x4x3x100xf32, #tpu.memory_space<vmem>>, vector<1x1x3x78xf32>
    %28 = vector.shape_cast %27 : vector<1x1x3x78xf32> to vector<3x78xf32>
    %c27 = arith.constant 27 : index
    %c0_47 = arith.constant 0 : index
    %29 = vector.load %arg17[%c27, %c0_47] : memref<75x78xf32, #tpu.memory_space<vmem>>, vector<3x78xf32>
    tpu.vector_store %arg17[%c27, %c0_47], %28 {strides = array<i32>} : memref<75x78xf32, #tpu.memory_space<vmem>>, vector<3x78xf32>,
    %c0_48 = arith.constant 0 : index
    %c0_49 = arith.constant 0 : index
    %c0_50 = arith.constant 0 : index
    %c10 = arith.constant 10 : index
    %30 = vector.load %arg1[%c0_48, %c0_49, %c0_50, %c10] : memref<1x4x3x100xf32, #tpu.memory_space<vmem>>, vector<1x1x3x78xf32>
    %31 = vector.shape_cast %30 : vector<1x1x3x78xf32> to vector<3x78xf32>
    %c30 = arith.constant 30 : index
    %c0_51 = arith.constant 0 : index
    %32 = vector.load %arg17[%c30, %c0_51] : memref<75x78xf32, #tpu.memory_space<vmem>>, vector<3x78xf32>
    tpu.vector_store %arg17[%c30, %c0_51], %31 {strides = array<i32>} : memref<75x78xf32, #tpu.memory_space<vmem>>, vector<3x78xf32>,
    %c0_52 = arith.constant 0 : index
    %c1_53 = arith.constant 1 : index
    %c0_54 = arith.constant 0 : index
    %c10_55 = arith.constant 10 : index
    %33 = vector.load %arg1[%c0_52, %c1_53, %c0_54, %c10_55] : memref<1x4x3x100xf32, #tpu.memory_space<vmem>>, vector<1x1x3x78xf32>
    %34 = vector.shape_cast %33 : vector<1x1x3x78xf32> to vector<3x78xf32>
    %c33 = arith.constant 33 : index
    %c0_56 = arith.constant 0 : index
    %35 = vector.load %arg17[%c33, %c0_56] : memref<75x78xf32, #tpu.memory_space<vmem>>, vector<3x78xf32>
    tpu.vector_store %arg17[%c33, %c0_56], %34 {strides = array<i32>} : memref<75x78xf32, #tpu.memory_space<vmem>>, vector<3x78xf32>,
    %c0_57 = arith.constant 0 : index
    %c0_58 = arith.constant 0 : index
    %c0_59 = arith.constant 0 : index
    %c11 = arith.constant 11 : index
    %36 = vector.load %arg1[%c0_57, %c0_58, %c0_59, %c11] : memref<1x4x3x100xf32, #tpu.memory_space<vmem>>, vector<1x1x3x78xf32>
    %37 = vector.shape_cast %36 : vector<1x1x3x78xf32> to vector<3x78xf32>
    %c36 = arith.constant 36 : index
    %c0_60 = arith.constant 0 : index
    %38 = vector.load %arg17[%c36, %c0_60] : memref<75x78xf32, #tpu.memory_space<vmem>>, vector<3x78xf32>
    tpu.vector_store %arg17[%c36, %c0_60], %37 {strides = array<i32>} : memref<75x78xf32, #tpu.memory_space<vmem>>, vector<3x78xf32>,
    %c0_61 = arith.constant 0 : index
    %c1_62 = arith.constant 1 : index
    %c0_63 = arith.constant 0 : index
    %c11_64 = arith.constant 11 : index
    %39 = vector.load %arg1[%c0_61, %c1_62, %c0_63, %c11_64] : memref<1x4x3x100xf32, #tpu.memory_space<vmem>>, vector<1x1x3x78xf32>
    %40 = vector.shape_cast %39 : vector<1x1x3x78xf32> to vector<3x78xf32>
    %c39 = arith.constant 39 : index
    %c0_65 = arith.constant 0 : index
    %41 = vector.load %arg17[%c39, %c0_65] : memref<75x78xf32, #tpu.memory_space<vmem>>, vector<3x78xf32>
    tpu.vector_store %arg17[%c39, %c0_65], %40 {strides = array<i32>} : memref<75x78xf32, #tpu.memory_space<vmem>>, vector<3x78xf32>,
    %c0_66 = arith.constant 0 : index
    %c0_67 = arith.constant 0 : index
    %c0_68 = arith.constant 0 : index
    %c12_69 = arith.constant 12 : index
    %42 = vector.load %arg1[%c0_66, %c0_67, %c0_68, %c12_69] : memref<1x4x3x100xf32, #tpu.memory_space<vmem>>, vector<1x1x3x78xf32>
    %43 = vector.shape_cast %42 : vector<1x1x3x78xf32> to vector<3x78xf32>
    %c42 = arith.constant 42 : index
    %c0_70 = arith.constant 0 : index
    %44 = vector.load %arg17[%c42, %c0_70] : memref<75x78xf32, #tpu.memory_space<vmem>>, vector<3x78xf32>
    tpu.vector_store %arg17[%c42, %c0_70], %43 {strides = array<i32>} : memref<75x78xf32, #tpu.memory_space<vmem>>, vector<3x78xf32>,
    %c0_71 = arith.constant 0 : index
    %c2_72 = arith.constant 2 : index
    %c0_73 = arith.constant 0 : index
    %c10_74 = arith.constant 10 : index
    %45 = vector.load %arg1[%c0_71, %c2_72, %c0_73, %c10_74] : memref<1x4x3x100xf32, #tpu.memory_space<vmem>>, vector<1x1x3x78xf32>
    %46 = vector.shape_cast %45 : vector<1x1x3x78xf32> to vector<3x78xf32>
    %c45 = arith.constant 45 : index
    %c0_75 = arith.constant 0 : index
    %47 = vector.load %arg17[%c45, %c0_75] : memref<75x78xf32, #tpu.memory_space<vmem>>, vector<3x78xf32>
    tpu.vector_store %arg17[%c45, %c0_75], %46 {strides = array<i32>} : memref<75x78xf32, #tpu.memory_space<vmem>>, vector<3x78xf32>,
    %c0_76 = arith.constant 0 : index
    %c3_77 = arith.constant 3 : index
    %c0_78 = arith.constant 0 : index
    %c10_79 = arith.constant 10 : index
    %48 = vector.load %arg1[%c0_76, %c3_77, %c0_78, %c10_79] : memref<1x4x3x100xf32, #tpu.memory_space<vmem>>, vector<1x1x3x78xf32>
    %49 = vector.shape_cast %48 : vector<1x1x3x78xf32> to vector<3x78xf32>
    %c48 = arith.constant 48 : index
    %c0_80 = arith.constant 0 : index
    %50 = vector.load %arg17[%c48, %c0_80] : memref<75x78xf32, #tpu.memory_space<vmem>>, vector<3x78xf32>
    tpu.vector_store %arg17[%c48, %c0_80], %49 {strides = array<i32>} : memref<75x78xf32, #tpu.memory_space<vmem>>, vector<3x78xf32>,
    %c0_81 = arith.constant 0 : index
    %c2_82 = arith.constant 2 : index
    %c0_83 = arith.constant 0 : index
    %c11_84 = arith.constant 11 : index
    %51 = vector.load %arg1[%c0_81, %c2_82, %c0_83, %c11_84] : memref<1x4x3x100xf32, #tpu.memory_space<vmem>>, vector<1x1x3x78xf32>
    %52 = vector.shape_cast %51 : vector<1x1x3x78xf32> to vector<3x78xf32>
    %c51 = arith.constant 51 : index
    %c0_85 = arith.constant 0 : index
    %53 = vector.load %arg17[%c51, %c0_85] : memref<75x78xf32, #tpu.memory_space<vmem>>, vector<3x78xf32>
    tpu.vector_store %arg17[%c51, %c0_85], %52 {strides = array<i32>} : memref<75x78xf32, #tpu.memory_space<vmem>>, vector<3x78xf32>,
    %c0_86 = arith.constant 0 : index
    %c3_87 = arith.constant 3 : index
    %c0_88 = arith.constant 0 : index
    %c11_89 = arith.constant 11 : index
    %54 = vector.load %arg1[%c0_86, %c3_87, %c0_88, %c11_89] : memref<1x4x3x100xf32, #tpu.memory_space<vmem>>, vector<1x1x3x78xf32>
    %55 = vector.shape_cast %54 : vector<1x1x3x78xf32> to vector<3x78xf32>
    %c54 = arith.constant 54 : index
    %c0_90 = arith.constant 0 : index
    %56 = vector.load %arg17[%c54, %c0_90] : memref<75x78xf32, #tpu.memory_space<vmem>>, vector<3x78xf32>
    tpu.vector_store %arg17[%c54, %c0_90], %55 {strides = array<i32>} : memref<75x78xf32, #tpu.memory_space<vmem>>, vector<3x78xf32>,
    %c0_91 = arith.constant 0 : index
    %c2_92 = arith.constant 2 : index
    %c0_93 = arith.constant 0 : index
    %c12_94 = arith.constant 12 : index
    %57 = vector.load %arg1[%c0_91, %c2_92, %c0_93, %c12_94] : memref<1x4x3x100xf32, #tpu.memory_space<vmem>>, vector<1x1x3x78xf32>
    %58 = vector.shape_cast %57 : vector<1x1x3x78xf32> to vector<3x78xf32>
    %c57 = arith.constant 57 : index
    %c0_95 = arith.constant 0 : index
    %59 = vector.load %arg17[%c57, %c0_95] : memref<75x78xf32, #tpu.memory_space<vmem>>, vector<3x78xf32>
    tpu.vector_store %arg17[%c57, %c0_95], %58 {strides = array<i32>} : memref<75x78xf32, #tpu.memory_space<vmem>>, vector<3x78xf32>,
    %c0_96 = arith.constant 0 : index
    %c0_97 = arith.constant 0 : index
    %c0_98 = arith.constant 0 : index
    %c20 = arith.constant 20 : index
    %60 = vector.load %arg1[%c0_96, %c0_97, %c0_98, %c20] : memref<1x4x3x100xf32, #tpu.memory_space<vmem>>, vector<1x1x3x78xf32>
    %61 = vector.shape_cast %60 : vector<1x1x3x78xf32> to vector<3x78xf32>
    %c60 = arith.constant 60 : index
    %c0_99 = arith.constant 0 : index
    %62 = vector.load %arg17[%c60, %c0_99] : memref<75x78xf32, #tpu.memory_space<vmem>>, vector<3x78xf32>
    tpu.vector_store %arg17[%c60, %c0_99], %61 {strides = array<i32>} : memref<75x78xf32, #tpu.memory_space<vmem>>, vector<3x78xf32>,
    %c0_100 = arith.constant 0 : index
    %c1_101 = arith.constant 1 : index
    %c0_102 = arith.constant 0 : index
    %c20_103 = arith.constant 20 : index
    %63 = vector.load %arg1[%c0_100, %c1_101, %c0_102, %c20_103] : memref<1x4x3x100xf32, #tpu.memory_space<vmem>>, vector<1x1x3x78xf32>
    %64 = vector.shape_cast %63 : vector<1x1x3x78xf32> to vector<3x78xf32>
    %c63 = arith.constant 63 : index
    %c0_104 = arith.constant 0 : index
    %65 = vector.load %arg17[%c63, %c0_104] : memref<75x78xf32, #tpu.memory_space<vmem>>, vector<3x78xf32>
    tpu.vector_store %arg17[%c63, %c0_104], %64 {strides = array<i32>} : memref<75x78xf32, #tpu.memory_space<vmem>>, vector<3x78xf32>,
    %c0_105 = arith.constant 0 : index
    %c0_106 = arith.constant 0 : index
    %c0_107 = arith.constant 0 : index
    %c21_108 = arith.constant 21 : index
    %66 = vector.load %arg1[%c0_105, %c0_106, %c0_107, %c21_108] : memref<1x4x3x100xf32, #tpu.memory_space<vmem>>, vector<1x1x3x78xf32>
    %67 = vector.shape_cast %66 : vector<1x1x3x78xf32> to vector<3x78xf32>
    %c66 = arith.constant 66 : index
    %c0_109 = arith.constant 0 : index
    %68 = vector.load %arg17[%c66, %c0_109] : memref<75x78xf32, #tpu.memory_space<vmem>>, vector<3x78xf32>
    tpu.vector_store %arg17[%c66, %c0_109], %67 {strides = array<i32>} : memref<75x78xf32, #tpu.memory_space<vmem>>, vector<3x78xf32>,
    %c0_110 = arith.constant 0 : index
    %c1_111 = arith.constant 1 : index
    %c0_112 = arith.constant 0 : index
    %c21_113 = arith.constant 21 : index
    %69 = vector.load %arg1[%c0_110, %c1_111, %c0_112, %c21_113] : memref<1x4x3x100xf32, #tpu.memory_space<vmem>>, vector<1x1x3x78xf32>
    %70 = vector.shape_cast %69 : vector<1x1x3x78xf32> to vector<3x78xf32>
    %c69 = arith.constant 69 : index
    %c0_114 = arith.constant 0 : index
    %71 = vector.load %arg17[%c69, %c0_114] : memref<75x78xf32, #tpu.memory_space<vmem>>, vector<3x78xf32>
    tpu.vector_store %arg17[%c69, %c0_114], %70 {strides = array<i32>} : memref<75x78xf32, #tpu.memory_space<vmem>>, vector<3x78xf32>,
    %c0_115 = arith.constant 0 : index
    %c0_116 = arith.constant 0 : index
    %c0_117 = arith.constant 0 : index
    %c22 = arith.constant 22 : index
    %72 = vector.load %arg1[%c0_115, %c0_116, %c0_117, %c22] : memref<1x4x3x100xf32, #tpu.memory_space<vmem>>, vector<1x1x3x78xf32>
    %73 = vector.shape_cast %72 : vector<1x1x3x78xf32> to vector<3x78xf32>
    %c72 = arith.constant 72 : index
    %c0_118 = arith.constant 0 : index
    %74 = vector.load %arg17[%c72, %c0_118] : memref<75x78xf32, #tpu.memory_space<vmem>>, vector<3x78xf32>
    tpu.vector_store %arg17[%c72, %c0_118], %73 {strides = array<i32>} : memref<75x78xf32, #tpu.memory_space<vmem>>, vector<3x78xf32>,
    %c0_119 = arith.constant 0 : index
    %c0_120 = arith.constant 0 : index
    %75 = vector.load %arg3[%c0_119, %c0_120] : memref<8x75xf32, #tpu.memory_space<vmem>>, vector<8x75xf32>
    %c0_121 = arith.constant 0 : index
    %c0_122 = arith.constant 0 : index
    %76 = vector.load %arg17[%c0_121, %c0_122] : memref<75x78xf32, #tpu.memory_space<vmem>>, vector<75x78xf32>
    %cst = arith.constant dense<0.000000e+00> : vector<8x78xf32>
    %77 = tpu.matmul %75, %76, %cst {dimension_numbers = #tpu.dot_dimension_numbers<[1], [0], [0], [1], [0, 0, 1, 1], [], []>} : vector<8x75xf32>, vector<75x78xf32>, vector<8x78xf32> -> vector<8x78xf32>
    %c0_123 = arith.constant 0 : index
    %c0_124 = arith.constant 0 : index
    %78 = vector.load %arg4[%c0_123, %c0_124] : memref<8x1xf32, #tpu.memory_space<vmem>>, vector<8x1xf32>
    %79 = vector.broadcast %78 : vector<8x1xf32> to vector<8x78xf32>
    %80 = arith.addf %77, %79 : vector<8x78xf32>
    %cst_125 = arith.constant 0.000000e+00 : f32
    %81 = vector.broadcast %cst_125 : f32 to vector<8x78xf32>
    %82 = arith.maximumf %80, %81 : vector<8x78xf32>
    %cst_126 = arith.constant 0.000000e+00 : f32
    %83 = vector.broadcast %cst_126 : f32 to vector<8x100xf32>
    %c0_127 = arith.constant 0 : index
    %c0_128 = arith.constant 0 : index
    %84 = vector.load %arg18[%c0_127, %c0_128] : memref<8x100xf32, #tpu.memory_space<vmem>>, vector<8x100xf32>
    tpu.vector_store %arg18[%c0_127, %c0_128], %83 {strides = array<i32>} : memref<8x100xf32, #tpu.memory_space<vmem>>, vector<8x100xf32>,
    %c0_129 = arith.constant 0 : index
    %c0_130 = arith.constant 0 : index
    %85 = vector.load %arg6[%c0_129, %c0_130] : memref<1x78xf32, #tpu.memory_space<vmem>>, vector<1x78xf32>
    %86 = vector.broadcast %85 : vector<1x78xf32> to vector<8x78xf32>
    %87 = arith.mulf %82, %86 : vector<8x78xf32>
    %c0_131 = arith.constant 0 : index
    %c11_132 = arith.constant 11 : index
    %88 = vector.load %arg18[%c0_131, %c11_132] : memref<8x100xf32, #tpu.memory_space<vmem>>, vector<8x78xf32>
    tpu.vector_store %arg18[%c0_131, %c11_132], %87 {strides = array<i32>} : memref<8x100xf32, #tpu.memory_space<vmem>>, vector<8x78xf32>,
    %cst_133 = arith.constant 0.000000e+00 : f32
    %89 = vector.broadcast %cst_133 : f32 to vector<8x36xf32>
    %c0_134 = arith.constant 0 : index
    %c0_135 = arith.constant 0 : index
    %90 = vector.load %arg19[%c0_134, %c0_135] : memref<8x36xf32, #tpu.memory_space<vmem>>, vector<8x36xf32>
    tpu.vector_store %arg19[%c0_134, %c0_135], %89 {strides = array<i32>} : memref<8x36xf32, #tpu.memory_space<vmem>>, vector<8x36xf32>,
    %c0_136 = arith.constant 0 : index
    %c0_137 = arith.constant 0 : index
    %91 = vector.load %arg18[%c0_136, %c0_137] : memref<8x100xf32, #tpu.memory_space<vmem>>, vector<8x10xf32>
    %c0_138 = arith.constant 0 : index
    %c10_139 = arith.constant 10 : index
    %92 = vector.load %arg18[%c0_138, %c10_139] : memref<8x100xf32, #tpu.memory_space<vmem>>, vector<8x10xf32>
    %93 = arith.maximumf %91, %92 : vector<8x10xf32>
    %c0_140 = arith.constant 0 : index
    %c20_141 = arith.constant 20 : index
    %94 = vector.load %arg18[%c0_140, %c20_141] : memref<8x100xf32, #tpu.memory_space<vmem>>, vector<8x10xf32>
    %95 = arith.maximumf %93, %94 : vector<8x10xf32>
    %96 = vector.extract_strided_slice %95 {offsets = [0, 0], sizes = [8, 8], strides = [1, 1]} : vector<8x10xf32> to vector<8x8xf32>
    %97 = vector.extract_strided_slice %95 {offsets = [0, 1], sizes = [8, 8], strides = [1, 1]} : vector<8x10xf32> to vector<8x8xf32>
    %98 = arith.maximumf %96, %97 : vector<8x8xf32>
    %99 = vector.extract_strided_slice %95 {offsets = [0, 2], sizes = [8, 8], strides = [1, 1]} : vector<8x10xf32> to vector<8x8xf32>
    %100 = arith.maximumf %98, %99 : vector<8x8xf32>
    %c0_142 = arith.constant 0 : index
    %c0_143 = arith.constant 0 : index
    %101 = vector.load %arg5[%c0_142, %c0_143] : memref<8x4xf32, #tpu.memory_space<vmem>>, vector<8x4xf32>
    %cst_144 = arith.constant dense<0.000000e+00> : vector<8x4xf32>
    %102 = tpu.matmul %100, %101, %cst_144 {dimension_numbers = #tpu.dot_dimension_numbers<[1], [0], [0], [1], [0, 0, 1, 1], [], []>} : vector<8x8xf32>, vector<8x4xf32>, vector<8x4xf32> -> vector<8x4xf32>
    %c0_145 = arith.constant 0 : index
    %c7 = arith.constant 7 : index
    %103 = vector.load %arg19[%c0_145, %c7] : memref<8x36xf32, #tpu.memory_space<vmem>>, vector<8x4xf32>
    tpu.vector_store %arg19[%c0_145, %c7], %102 {strides = array<i32>} : memref<8x36xf32, #tpu.memory_space<vmem>>, vector<8x4xf32>,
    %c0_146 = arith.constant 0 : index
    %c20_147 = arith.constant 20 : index
    %104 = vector.load %arg18[%c0_146, %c20_147] : memref<8x100xf32, #tpu.memory_space<vmem>>, vector<8x10xf32>
    %c0_148 = arith.constant 0 : index
    %c30_149 = arith.constant 30 : index
    %105 = vector.load %arg18[%c0_148, %c30_149] : memref<8x100xf32, #tpu.memory_space<vmem>>, vector<8x10xf32>
    %106 = arith.maximumf %104, %105 : vector<8x10xf32>
    %c0_150 = arith.constant 0 : index
    %c40 = arith.constant 40 : index
    %107 = vector.load %arg18[%c0_150, %c40] : memref<8x100xf32, #tpu.memory_space<vmem>>, vector<8x10xf32>
    %108 = arith.maximumf %106, %107 : vector<8x10xf32>
    %109 = vector.extract_strided_slice %108 {offsets = [0, 0], sizes = [8, 8], strides = [1, 1]} : vector<8x10xf32> to vector<8x8xf32>
    %110 = vector.extract_strided_slice %108 {offsets = [0, 1], sizes = [8, 8], strides = [1, 1]} : vector<8x10xf32> to vector<8x8xf32>
    %111 = arith.maximumf %109, %110 : vector<8x8xf32>
    %112 = vector.extract_strided_slice %108 {offsets = [0, 2], sizes = [8, 8], strides = [1, 1]} : vector<8x10xf32> to vector<8x8xf32>
    %113 = arith.maximumf %111, %112 : vector<8x8xf32>
    %c0_151 = arith.constant 0 : index
    %c0_152 = arith.constant 0 : index
    %114 = vector.load %arg5[%c0_151, %c0_152] : memref<8x4xf32, #tpu.memory_space<vmem>>, vector<8x4xf32>
    %cst_153 = arith.constant dense<0.000000e+00> : vector<8x4xf32>
    %115 = tpu.matmul %113, %114, %cst_153 {dimension_numbers = #tpu.dot_dimension_numbers<[1], [0], [0], [1], [0, 0, 1, 1], [], []>} : vector<8x8xf32>, vector<8x4xf32>, vector<8x4xf32> -> vector<8x4xf32>
    %c0_154 = arith.constant 0 : index
    %c13 = arith.constant 13 : index
    %116 = vector.load %arg19[%c0_154, %c13] : memref<8x36xf32, #tpu.memory_space<vmem>>, vector<8x4xf32>
    tpu.vector_store %arg19[%c0_154, %c13], %115 {strides = array<i32>} : memref<8x36xf32, #tpu.memory_space<vmem>>, vector<8x4xf32>,
    %c0_155 = arith.constant 0 : index
    %c40_156 = arith.constant 40 : index
    %117 = vector.load %arg18[%c0_155, %c40_156] : memref<8x100xf32, #tpu.memory_space<vmem>>, vector<8x10xf32>
    %c0_157 = arith.constant 0 : index
    %c50 = arith.constant 50 : index
    %118 = vector.load %arg18[%c0_157, %c50] : memref<8x100xf32, #tpu.memory_space<vmem>>, vector<8x10xf32>
    %119 = arith.maximumf %117, %118 : vector<8x10xf32>
    %c0_158 = arith.constant 0 : index
    %c60_159 = arith.constant 60 : index
    %120 = vector.load %arg18[%c0_158, %c60_159] : memref<8x100xf32, #tpu.memory_space<vmem>>, vector<8x10xf32>
    %121 = arith.maximumf %119, %120 : vector<8x10xf32>
    %122 = vector.extract_strided_slice %121 {offsets = [0, 0], sizes = [8, 8], strides = [1, 1]} : vector<8x10xf32> to vector<8x8xf32>
    %123 = vector.extract_strided_slice %121 {offsets = [0, 1], sizes = [8, 8], strides = [1, 1]} : vector<8x10xf32> to vector<8x8xf32>
    %124 = arith.maximumf %122, %123 : vector<8x8xf32>
    %125 = vector.extract_strided_slice %121 {offsets = [0, 2], sizes = [8, 8], strides = [1, 1]} : vector<8x10xf32> to vector<8x8xf32>
    %126 = arith.maximumf %124, %125 : vector<8x8xf32>
    %c0_160 = arith.constant 0 : index
    %c0_161 = arith.constant 0 : index
    %127 = vector.load %arg5[%c0_160, %c0_161] : memref<8x4xf32, #tpu.memory_space<vmem>>, vector<8x4xf32>
    %cst_162 = arith.constant dense<0.000000e+00> : vector<8x4xf32>
    %128 = tpu.matmul %126, %127, %cst_162 {dimension_numbers = #tpu.dot_dimension_numbers<[1], [0], [0], [1], [0, 0, 1, 1], [], []>} : vector<8x8xf32>, vector<8x4xf32>, vector<8x4xf32> -> vector<8x4xf32>
    %c0_163 = arith.constant 0 : index
    %c19 = arith.constant 19 : index
    %129 = vector.load %arg19[%c0_163, %c19] : memref<8x36xf32, #tpu.memory_space<vmem>>, vector<8x4xf32>
    tpu.vector_store %arg19[%c0_163, %c19], %128 {strides = array<i32>} : memref<8x36xf32, #tpu.memory_space<vmem>>, vector<8x4xf32>,
    %c0_164 = arith.constant 0 : index
    %c60_165 = arith.constant 60 : index
    %130 = vector.load %arg18[%c0_164, %c60_165] : memref<8x100xf32, #tpu.memory_space<vmem>>, vector<8x10xf32>
    %c0_166 = arith.constant 0 : index
    %c70 = arith.constant 70 : index
    %131 = vector.load %arg18[%c0_166, %c70] : memref<8x100xf32, #tpu.memory_space<vmem>>, vector<8x10xf32>
    %132 = arith.maximumf %130, %131 : vector<8x10xf32>
    %c0_167 = arith.constant 0 : index
    %c80 = arith.constant 80 : index
    %133 = vector.load %arg18[%c0_167, %c80] : memref<8x100xf32, #tpu.memory_space<vmem>>, vector<8x10xf32>
    %134 = arith.maximumf %132, %133 : vector<8x10xf32>
    %135 = vector.extract_strided_slice %134 {offsets = [0, 0], sizes = [8, 8], strides = [1, 1]} : vector<8x10xf32> to vector<8x8xf32>
    %136 = vector.extract_strided_slice %134 {offsets = [0, 1], sizes = [8, 8], strides = [1, 1]} : vector<8x10xf32> to vector<8x8xf32>
    %137 = arith.maximumf %135, %136 : vector<8x8xf32>
    %138 = vector.extract_strided_slice %134 {offsets = [0, 2], sizes = [8, 8], strides = [1, 1]} : vector<8x10xf32> to vector<8x8xf32>
    %139 = arith.maximumf %137, %138 : vector<8x8xf32>
    %c0_168 = arith.constant 0 : index
    %c0_169 = arith.constant 0 : index
    %140 = vector.load %arg5[%c0_168, %c0_169] : memref<8x4xf32, #tpu.memory_space<vmem>>, vector<8x4xf32>
    %cst_170 = arith.constant dense<0.000000e+00> : vector<8x4xf32>
    %141 = tpu.matmul %139, %140, %cst_170 {dimension_numbers = #tpu.dot_dimension_numbers<[1], [0], [0], [1], [0, 0, 1, 1], [], []>} : vector<8x8xf32>, vector<8x4xf32>, vector<8x4xf32> -> vector<8x4xf32>
    %c0_171 = arith.constant 0 : index
    %c25 = arith.constant 25 : index
    %142 = vector.load %arg19[%c0_171, %c25] : memref<8x36xf32, #tpu.memory_space<vmem>>, vector<8x4xf32>
    tpu.vector_store %arg19[%c0_171, %c25], %141 {strides = array<i32>} : memref<8x36xf32, #tpu.memory_space<vmem>>, vector<8x4xf32>,
    %c0_172 = arith.constant 0 : index
    %c0_173 = arith.constant 0 : index
    %143 = vector.load %arg11[%c0_172, %c0_173] : memref<1x22xf32, #tpu.memory_space<vmem>>, vector<1x22xf32>
    %c0_174 = arith.constant 0 : index
    %c7_175 = arith.constant 7 : index
    %144 = vector.load %arg19[%c0_174, %c7_175] : memref<8x36xf32, #tpu.memory_space<vmem>>, vector<8x22xf32>
    %c0_176 = arith.constant 0 : index
    %c0_177 = arith.constant 0 : index
    %145 = vector.load %arg19[%c0_176, %c0_177] : memref<8x36xf32, #tpu.memory_space<vmem>>, vector<8x22xf32>
    %c0_178 = arith.constant 0 : index
    %c0_179 = arith.constant 0 : index
    %146 = vector.load %arg21[%c0_178, %c0_179] : memref<72x22xf32, #tpu.memory_space<vmem>>, vector<8x22xf32>
    tpu.vector_store %arg21[%c0_178, %c0_179], %145 {strides = array<i32>} : memref<72x22xf32, #tpu.memory_space<vmem>>, vector<8x22xf32>,
    %c0_180 = arith.constant 0 : index
    %c1_181 = arith.constant 1 : index
    %147 = vector.load %arg19[%c0_180, %c1_181] : memref<8x36xf32, #tpu.memory_space<vmem>>, vector<8x22xf32>
    %c8 = arith.constant 8 : index
    %c0_182 = arith.constant 0 : index
    %148 = vector.load %arg21[%c8, %c0_182] : memref<72x22xf32, #tpu.memory_space<vmem>>, vector<8x22xf32>
    tpu.vector_store %arg21[%c8, %c0_182], %147 {strides = array<i32>} : memref<72x22xf32, #tpu.memory_space<vmem>>, vector<8x22xf32>,
    %c0_183 = arith.constant 0 : index
    %c2_184 = arith.constant 2 : index
    %149 = vector.load %arg19[%c0_183, %c2_184] : memref<8x36xf32, #tpu.memory_space<vmem>>, vector<8x22xf32>
    %c16 = arith.constant 16 : index
    %c0_185 = arith.constant 0 : index
    %150 = vector.load %arg21[%c16, %c0_185] : memref<72x22xf32, #tpu.memory_space<vmem>>, vector<8x22xf32>
    tpu.vector_store %arg21[%c16, %c0_185], %149 {strides = array<i32>} : memref<72x22xf32, #tpu.memory_space<vmem>>, vector<8x22xf32>,
    %c0_186 = arith.constant 0 : index
    %c6_187 = arith.constant 6 : index
    %151 = vector.load %arg19[%c0_186, %c6_187] : memref<8x36xf32, #tpu.memory_space<vmem>>, vector<8x22xf32>
    %c24_188 = arith.constant 24 : index
    %c0_189 = arith.constant 0 : index
    %152 = vector.load %arg21[%c24_188, %c0_189] : memref<72x22xf32, #tpu.memory_space<vmem>>, vector<8x22xf32>
    tpu.vector_store %arg21[%c24_188, %c0_189], %151 {strides = array<i32>} : memref<72x22xf32, #tpu.memory_space<vmem>>, vector<8x22xf32>,
    %c0_190 = arith.constant 0 : index
    %c7_191 = arith.constant 7 : index
    %153 = vector.load %arg19[%c0_190, %c7_191] : memref<8x36xf32, #tpu.memory_space<vmem>>, vector<8x22xf32>
    %c32 = arith.constant 32 : index
    %c0_192 = arith.constant 0 : index
    %154 = vector.load %arg21[%c32, %c0_192] : memref<72x22xf32, #tpu.memory_space<vmem>>, vector<8x22xf32>
    tpu.vector_store %arg21[%c32, %c0_192], %153 {strides = array<i32>} : memref<72x22xf32, #tpu.memory_space<vmem>>, vector<8x22xf32>,
    %c0_193 = arith.constant 0 : index
    %c8_194 = arith.constant 8 : index
    %155 = vector.load %arg19[%c0_193, %c8_194] : memref<8x36xf32, #tpu.memory_space<vmem>>, vector<8x22xf32>
    %c40_195 = arith.constant 40 : index
    %c0_196 = arith.constant 0 : index
    %156 = vector.load %arg21[%c40_195, %c0_196] : memref<72x22xf32, #tpu.memory_space<vmem>>, vector<8x22xf32>
    tpu.vector_store %arg21[%c40_195, %c0_196], %155 {strides = array<i32>} : memref<72x22xf32, #tpu.memory_space<vmem>>, vector<8x22xf32>,
    %c0_197 = arith.constant 0 : index
    %c12_198 = arith.constant 12 : index
    %157 = vector.load %arg19[%c0_197, %c12_198] : memref<8x36xf32, #tpu.memory_space<vmem>>, vector<8x22xf32>
    %c48_199 = arith.constant 48 : index
    %c0_200 = arith.constant 0 : index
    %158 = vector.load %arg21[%c48_199, %c0_200] : memref<72x22xf32, #tpu.memory_space<vmem>>, vector<8x22xf32>
    tpu.vector_store %arg21[%c48_199, %c0_200], %157 {strides = array<i32>} : memref<72x22xf32, #tpu.memory_space<vmem>>, vector<8x22xf32>,
    %c0_201 = arith.constant 0 : index
    %c13_202 = arith.constant 13 : index
    %159 = vector.load %arg19[%c0_201, %c13_202] : memref<8x36xf32, #tpu.memory_space<vmem>>, vector<8x22xf32>
    %c56 = arith.constant 56 : index
    %c0_203 = arith.constant 0 : index
    %160 = vector.load %arg21[%c56, %c0_203] : memref<72x22xf32, #tpu.memory_space<vmem>>, vector<8x22xf32>
    tpu.vector_store %arg21[%c56, %c0_203], %159 {strides = array<i32>} : memref<72x22xf32, #tpu.memory_space<vmem>>, vector<8x22xf32>,
    %c0_204 = arith.constant 0 : index
    %c14 = arith.constant 14 : index
    %161 = vector.load %arg19[%c0_204, %c14] : memref<8x36xf32, #tpu.memory_space<vmem>>, vector<8x22xf32>
    %c64 = arith.constant 64 : index
    %c0_205 = arith.constant 0 : index
    %162 = vector.load %arg21[%c64, %c0_205] : memref<72x22xf32, #tpu.memory_space<vmem>>, vector<8x22xf32>
    tpu.vector_store %arg21[%c64, %c0_205], %161 {strides = array<i32>} : memref<72x22xf32, #tpu.memory_space<vmem>>, vector<8x22xf32>,
    %c0_206 = arith.constant 0 : index
    %c0_207 = arith.constant 0 : index
    %c0_208 = arith.constant 0 : index
    %163 = vector.load %arg7[%c0_206, %c0_207, %c0_208] : memref<1x8x72xf32, #tpu.memory_space<vmem>>, vector<1x8x72xf32>
    %164 = vector.shape_cast %163 : vector<1x8x72xf32> to vector<8x72xf32>
    %c0_209 = arith.constant 0 : index
    %c0_210 = arith.constant 0 : index
    %165 = vector.load %arg21[%c0_209, %c0_210] : memref<72x22xf32, #tpu.memory_space<vmem>>, vector<72x22xf32>
    %cst_211 = arith.constant dense<0.000000e+00> : vector<8x22xf32>
    %166 = tpu.matmul %164, %165, %cst_211 {dimension_numbers = #tpu.dot_dimension_numbers<[1], [0], [0], [1], [0, 0, 1, 1], [], []>} : vector<8x72xf32>, vector<72x22xf32>, vector<8x22xf32> -> vector<8x22xf32>
    %c0_212 = arith.constant 0 : index
    %c0_213 = arith.constant 0 : index
    %c0_214 = arith.constant 0 : index
    %167 = vector.load %arg8[%c0_212, %c0_213, %c0_214] : memref<1x8x1xf32, #tpu.memory_space<vmem>>, vector<1x8x1xf32>
    %168 = vector.shape_cast %167 : vector<1x8x1xf32> to vector<8x1xf32>
    %169 = vector.broadcast %168 : vector<8x1xf32> to vector<8x22xf32>
    %170 = arith.addf %166, %169 : vector<8x22xf32>
    %cst_215 = arith.constant 0.000000e+00 : f32
    %171 = vector.broadcast %cst_215 : f32 to vector<8x22xf32>
    %172 = arith.maximumf %170, %171 : vector<8x22xf32>
    %cst_216 = arith.constant 0.000000e+00 : f32
    %173 = vector.broadcast %cst_216 : f32 to vector<8x36xf32>
    %c0_217 = arith.constant 0 : index
    %c0_218 = arith.constant 0 : index
    %174 = vector.load %arg20[%c0_217, %c0_218] : memref<8x36xf32, #tpu.memory_space<vmem>>, vector<8x36xf32>
    tpu.vector_store %arg20[%c0_217, %c0_218], %173 {strides = array<i32>} : memref<8x36xf32, #tpu.memory_space<vmem>>, vector<8x36xf32>,
    %175 = vector.broadcast %143 : vector<1x22xf32> to vector<8x22xf32>
    %176 = arith.mulf %172, %175 : vector<8x22xf32>
    %c0_219 = arith.constant 0 : index
    %c7_220 = arith.constant 7 : index
    %177 = vector.load %arg20[%c0_219, %c7_220] : memref<8x36xf32, #tpu.memory_space<vmem>>, vector<8x22xf32>
    tpu.vector_store %arg20[%c0_219, %c7_220], %176 {strides = array<i32>} : memref<8x36xf32, #tpu.memory_space<vmem>>, vector<8x22xf32>,
    %c0_221 = arith.constant 0 : index
    %c0_222 = arith.constant 0 : index
    %178 = vector.load %arg20[%c0_221, %c0_222] : memref<8x36xf32, #tpu.memory_space<vmem>>, vector<8x22xf32>
    %c0_223 = arith.constant 0 : index
    %c0_224 = arith.constant 0 : index
    %179 = vector.load %arg21[%c0_223, %c0_224] : memref<72x22xf32, #tpu.memory_space<vmem>>, vector<8x22xf32>
    tpu.vector_store %arg21[%c0_223, %c0_224], %178 {strides = array<i32>} : memref<72x22xf32, #tpu.memory_space<vmem>>, vector<8x22xf32>,
    %c0_225 = arith.constant 0 : index
    %c1_226 = arith.constant 1 : index
    %180 = vector.load %arg20[%c0_225, %c1_226] : memref<8x36xf32, #tpu.memory_space<vmem>>, vector<8x22xf32>
    %c8_227 = arith.constant 8 : index
    %c0_228 = arith.constant 0 : index
    %181 = vector.load %arg21[%c8_227, %c0_228] : memref<72x22xf32, #tpu.memory_space<vmem>>, vector<8x22xf32>
    tpu.vector_store %arg21[%c8_227, %c0_228], %180 {strides = array<i32>} : memref<72x22xf32, #tpu.memory_space<vmem>>, vector<8x22xf32>,
    %c0_229 = arith.constant 0 : index
    %c2_230 = arith.constant 2 : index
    %182 = vector.load %arg20[%c0_229, %c2_230] : memref<8x36xf32, #tpu.memory_space<vmem>>, vector<8x22xf32>
    %c16_231 = arith.constant 16 : index
    %c0_232 = arith.constant 0 : index
    %183 = vector.load %arg21[%c16_231, %c0_232] : memref<72x22xf32, #tpu.memory_space<vmem>>, vector<8x22xf32>
    tpu.vector_store %arg21[%c16_231, %c0_232], %182 {strides = array<i32>} : memref<72x22xf32, #tpu.memory_space<vmem>>, vector<8x22xf32>,
    %c0_233 = arith.constant 0 : index
    %c6_234 = arith.constant 6 : index
    %184 = vector.load %arg20[%c0_233, %c6_234] : memref<8x36xf32, #tpu.memory_space<vmem>>, vector<8x22xf32>
    %c24_235 = arith.constant 24 : index
    %c0_236 = arith.constant 0 : index
    %185 = vector.load %arg21[%c24_235, %c0_236] : memref<72x22xf32, #tpu.memory_space<vmem>>, vector<8x22xf32>
    tpu.vector_store %arg21[%c24_235, %c0_236], %184 {strides = array<i32>} : memref<72x22xf32, #tpu.memory_space<vmem>>, vector<8x22xf32>,
    %c0_237 = arith.constant 0 : index
    %c7_238 = arith.constant 7 : index
    %186 = vector.load %arg20[%c0_237, %c7_238] : memref<8x36xf32, #tpu.memory_space<vmem>>, vector<8x22xf32>
    %c32_239 = arith.constant 32 : index
    %c0_240 = arith.constant 0 : index
    %187 = vector.load %arg21[%c32_239, %c0_240] : memref<72x22xf32, #tpu.memory_space<vmem>>, vector<8x22xf32>
    tpu.vector_store %arg21[%c32_239, %c0_240], %186 {strides = array<i32>} : memref<72x22xf32, #tpu.memory_space<vmem>>, vector<8x22xf32>,
    %c0_241 = arith.constant 0 : index
    %c8_242 = arith.constant 8 : index
    %188 = vector.load %arg20[%c0_241, %c8_242] : memref<8x36xf32, #tpu.memory_space<vmem>>, vector<8x22xf32>
    %c40_243 = arith.constant 40 : index
    %c0_244 = arith.constant 0 : index
    %189 = vector.load %arg21[%c40_243, %c0_244] : memref<72x22xf32, #tpu.memory_space<vmem>>, vector<8x22xf32>
    tpu.vector_store %arg21[%c40_243, %c0_244], %188 {strides = array<i32>} : memref<72x22xf32, #tpu.memory_space<vmem>>, vector<8x22xf32>,
    %c0_245 = arith.constant 0 : index
    %c12_246 = arith.constant 12 : index
    %190 = vector.load %arg20[%c0_245, %c12_246] : memref<8x36xf32, #tpu.memory_space<vmem>>, vector<8x22xf32>
    %c48_247 = arith.constant 48 : index
    %c0_248 = arith.constant 0 : index
    %191 = vector.load %arg21[%c48_247, %c0_248] : memref<72x22xf32, #tpu.memory_space<vmem>>, vector<8x22xf32>
    tpu.vector_store %arg21[%c48_247, %c0_248], %190 {strides = array<i32>} : memref<72x22xf32, #tpu.memory_space<vmem>>, vector<8x22xf32>,
    %c0_249 = arith.constant 0 : index
    %c13_250 = arith.constant 13 : index
    %192 = vector.load %arg20[%c0_249, %c13_250] : memref<8x36xf32, #tpu.memory_space<vmem>>, vector<8x22xf32>
    %c56_251 = arith.constant 56 : index
    %c0_252 = arith.constant 0 : index
    %193 = vector.load %arg21[%c56_251, %c0_252] : memref<72x22xf32, #tpu.memory_space<vmem>>, vector<8x22xf32>
    tpu.vector_store %arg21[%c56_251, %c0_252], %192 {strides = array<i32>} : memref<72x22xf32, #tpu.memory_space<vmem>>, vector<8x22xf32>,
    %c0_253 = arith.constant 0 : index
    %c14_254 = arith.constant 14 : index
    %194 = vector.load %arg20[%c0_253, %c14_254] : memref<8x36xf32, #tpu.memory_space<vmem>>, vector<8x22xf32>
    %c64_255 = arith.constant 64 : index
    %c0_256 = arith.constant 0 : index
    %195 = vector.load %arg21[%c64_255, %c0_256] : memref<72x22xf32, #tpu.memory_space<vmem>>, vector<8x22xf32>
    tpu.vector_store %arg21[%c64_255, %c0_256], %194 {strides = array<i32>} : memref<72x22xf32, #tpu.memory_space<vmem>>, vector<8x22xf32>,
    %c0_257 = arith.constant 0 : index
    %c0_258 = arith.constant 0 : index
    %c0_259 = arith.constant 0 : index
    %196 = vector.load %arg9[%c0_257, %c0_258, %c0_259] : memref<1x8x72xf32, #tpu.memory_space<vmem>>, vector<1x8x72xf32>
    %197 = vector.shape_cast %196 : vector<1x8x72xf32> to vector<8x72xf32>
    %c0_260 = arith.constant 0 : index
    %c0_261 = arith.constant 0 : index
    %198 = vector.load %arg21[%c0_260, %c0_261] : memref<72x22xf32, #tpu.memory_space<vmem>>, vector<72x22xf32>
    %cst_262 = arith.constant dense<0.000000e+00> : vector<8x22xf32>
    %199 = tpu.matmul %197, %198, %cst_262 {dimension_numbers = #tpu.dot_dimension_numbers<[1], [0], [0], [1], [0, 0, 1, 1], [], []>} : vector<8x72xf32>, vector<72x22xf32>, vector<8x22xf32> -> vector<8x22xf32>
    %c0_263 = arith.constant 0 : index
    %c0_264 = arith.constant 0 : index
    %c0_265 = arith.constant 0 : index
    %200 = vector.load %arg10[%c0_263, %c0_264, %c0_265] : memref<1x8x1xf32, #tpu.memory_space<vmem>>, vector<1x8x1xf32>
    %201 = vector.shape_cast %200 : vector<1x8x1xf32> to vector<8x1xf32>
    %202 = vector.broadcast %201 : vector<8x1xf32> to vector<8x22xf32>
    %203 = arith.addf %199, %202 : vector<8x22xf32>
    %204 = arith.addf %203, %144 : vector<8x22xf32>
    %cst_266 = arith.constant 0.000000e+00 : f32
    %205 = vector.broadcast %cst_266 : f32 to vector<8x22xf32>
    %206 = arith.maximumf %204, %205 : vector<8x22xf32>
    %c0_267 = arith.constant 0 : index
    %c0_268 = arith.constant 0 : index
    %207 = vector.load %arg12[%c0_267, %c0_268] : memref<3x8xf32, #tpu.memory_space<vmem>>, vector<3x8xf32>
    %cst_269 = arith.constant dense<0.000000e+00> : vector<3x22xf32>
    %208 = tpu.matmul %207, %206, %cst_269 {dimension_numbers = #tpu.dot_dimension_numbers<[1], [0], [0], [1], [0, 0, 1, 1], [], []>} : vector<3x8xf32>, vector<8x22xf32>, vector<3x22xf32> -> vector<3x22xf32>
    %c0_270 = arith.constant 0 : index
    %c0_271 = arith.constant 0 : index
    %209 = vector.load %arg13[%c0_270, %c0_271] : memref<3x1xf32, #tpu.memory_space<vmem>>, vector<3x1xf32>
    %210 = vector.broadcast %209 : vector<3x1xf32> to vector<3x22xf32>
    %211 = arith.addf %208, %210 : vector<3x22xf32>
    %212 = vector.extract_strided_slice %211 {offsets = [0, 0], sizes = [3, 4], strides = [1, 1]} : vector<3x22xf32> to vector<3x4xf32>
    %c0_272 = arith.constant 0 : index
    %c0_273 = arith.constant 0 : index
    %c0_274 = arith.constant 0 : index
    %213 = vector.load %arg22[%c0_272, %c0_273, %c0_274] : memref<3x4x4xf32, #tpu.memory_space<vmem>>, vector<3x1x4xf32>
    %214 = vector.shape_cast %213 : vector<3x1x4xf32> to vector<3x4xf32>
    %215 = vector.shape_cast %212 : vector<3x4xf32> to vector<3x1x4xf32>
    tpu.vector_store %arg22[%c0_272, %c0_273, %c0_274], %215 {strides = array<i32>} : memref<3x4x4xf32, #tpu.memory_space<vmem>>, vector<3x1x4xf32>,
    %216 = vector.extract_strided_slice %211 {offsets = [0, 6], sizes = [3, 4], strides = [1, 1]} : vector<3x22xf32> to vector<3x4xf32>
    %c0_275 = arith.constant 0 : index
    %c1_276 = arith.constant 1 : index
    %c0_277 = arith.constant 0 : index
    %217 = vector.load %arg22[%c0_275, %c1_276, %c0_277] : memref<3x4x4xf32, #tpu.memory_space<vmem>>, vector<3x1x4xf32>
    %218 = vector.shape_cast %217 : vector<3x1x4xf32> to vector<3x4xf32>
    %219 = vector.shape_cast %216 : vector<3x4xf32> to vector<3x1x4xf32>
    tpu.vector_store %arg22[%c0_275, %c1_276, %c0_277], %219 {strides = array<i32>} : memref<3x4x4xf32, #tpu.memory_space<vmem>>, vector<3x1x4xf32>,
    %220 = vector.extract_strided_slice %211 {offsets = [0, 12], sizes = [3, 4], strides = [1, 1]} : vector<3x22xf32> to vector<3x4xf32>
    %c0_278 = arith.constant 0 : index
    %c2_279 = arith.constant 2 : index
    %c0_280 = arith.constant 0 : index
    %221 = vector.load %arg22[%c0_278, %c2_279, %c0_280] : memref<3x4x4xf32, #tpu.memory_space<vmem>>, vector<3x1x4xf32>
    %222 = vector.shape_cast %221 : vector<3x1x4xf32> to vector<3x4xf32>
    %223 = vector.shape_cast %220 : vector<3x4xf32> to vector<3x1x4xf32>
    tpu.vector_store %arg22[%c0_278, %c2_279, %c0_280], %223 {strides = array<i32>} : memref<3x4x4xf32, #tpu.memory_space<vmem>>, vector<3x1x4xf32>,
    %224 = vector.extract_strided_slice %211 {offsets = [0, 18], sizes = [3, 4], strides = [1, 1]} : vector<3x22xf32> to vector<3x4xf32>
    %c0_281 = arith.constant 0 : index
    %c3_282 = arith.constant 3 : index
    %c0_283 = arith.constant 0 : index
    %225 = vector.load %arg22[%c0_281, %c3_282, %c0_283] : memref<3x4x4xf32, #tpu.memory_space<vmem>>, vector<3x1x4xf32>
    %226 = vector.shape_cast %225 : vector<3x1x4xf32> to vector<3x4xf32>
    %227 = vector.shape_cast %224 : vector<3x4xf32> to vector<3x1x4xf32>
    tpu.vector_store %arg22[%c0_281, %c3_282, %c0_283], %227 {strides = array<i32>} : memref<3x4x4xf32, #tpu.memory_space<vmem>>, vector<3x1x4xf32>,
    %c0_284 = arith.constant 0 : index
    %c0_285 = arith.constant 0 : index
    %228 = vector.load %arg14[%c0_284, %c0_285] : memref<16x4xf32, #tpu.memory_space<vmem>>, vector<16x4xf32>
    %c0_286 = arith.constant 0 : index
    %c0_287 = arith.constant 0 : index
    %229 = vector.load %arg15[%c0_286, %c0_287] : memref<4x16xf32, #tpu.memory_space<vmem>>, vector<4x16xf32>
    %c0_288 = arith.constant 0 : index
    %c0_289 = arith.constant 0 : index
    %c0_290 = arith.constant 0 : index
    %230 = vector.load %arg22[%c0_288, %c0_289, %c0_290] : memref<3x4x4xf32, #tpu.memory_space<vmem>>, vector<1x4x4xf32>
    %231 = vector.shape_cast %230 : vector<1x4x4xf32> to vector<4x4xf32>
    %cst_291 = arith.constant dense<0.000000e+00> : vector<16x4xf32>
    %232 = tpu.matmul %228, %231, %cst_291 {dimension_numbers = #tpu.dot_dimension_numbers<[1], [0], [0], [1], [0, 0, 1, 1], [], []>} : vector<16x4xf32>, vector<4x4xf32>, vector<16x4xf32> -> vector<16x4xf32>
    %cst_292 = arith.constant dense<0.000000e+00> : vector<16x16xf32>
    %233 = tpu.matmul %232, %229, %cst_292 {dimension_numbers = #tpu.dot_dimension_numbers<[1], [0], [0], [1], [0, 0, 1, 1], [], []>} : vector<16x4xf32>, vector<4x16xf32>, vector<16x16xf32> -> vector<16x16xf32>
    %c0_293 = arith.constant 0 : index
    %c0_294 = arith.constant 0 : index
    %c0_295 = arith.constant 0 : index
    %c0_296 = arith.constant 0 : index
    %234 = vector.load %arg2[%c0_293, %c0_294, %c0_295, %c0_296] : memref<1x3x16x16xf32, #tpu.memory_space<vmem>>, vector<1x1x16x16xf32>
    %235 = vector.shape_cast %234 : vector<1x1x16x16xf32> to vector<16x16xf32>
    %cst_297 = arith.constant 1.000000e+00 : f32
    %236 = vector.broadcast %cst_297 : f32 to vector<16x16xf32>
    %237 = arith.mulf %236, %235 : vector<16x16xf32>
    %238 = arith.addf %233, %237 : vector<16x16xf32>
    %c0_298 = arith.constant 0 : index
    %c0_299 = arith.constant 0 : index
    %c0_300 = arith.constant 0 : index
    %c0_301 = arith.constant 0 : index
    %239 = vector.load %arg16[%c0_298, %c0_299, %c0_300, %c0_301] : memref<1x3x16x16xf32, #tpu.memory_space<vmem>>, vector<1x1x16x16xf32>
    %240 = vector.shape_cast %239 : vector<1x1x16x16xf32> to vector<16x16xf32>
    %241 = vector.shape_cast %238 : vector<16x16xf32> to vector<1x1x16x16xf32>
    tpu.vector_store %arg16[%c0_298, %c0_299, %c0_300, %c0_301], %241 {strides = array<i32>} : memref<1x3x16x16xf32, #tpu.memory_space<vmem>>, vector<1x1x16x16xf32>,
    %c1_302 = arith.constant 1 : index
    %c0_303 = arith.constant 0 : index
    %c0_304 = arith.constant 0 : index
    %242 = vector.load %arg22[%c1_302, %c0_303, %c0_304] : memref<3x4x4xf32, #tpu.memory_space<vmem>>, vector<1x4x4xf32>
    %243 = vector.shape_cast %242 : vector<1x4x4xf32> to vector<4x4xf32>
    %cst_305 = arith.constant dense<0.000000e+00> : vector<16x4xf32>
    %244 = tpu.matmul %228, %243, %cst_305 {dimension_numbers = #tpu.dot_dimension_numbers<[1], [0], [0], [1], [0, 0, 1, 1], [], []>} : vector<16x4xf32>, vector<4x4xf32>, vector<16x4xf32> -> vector<16x4xf32>
    %cst_306 = arith.constant dense<0.000000e+00> : vector<16x16xf32>
    %245 = tpu.matmul %244, %229, %cst_306 {dimension_numbers = #tpu.dot_dimension_numbers<[1], [0], [0], [1], [0, 0, 1, 1], [], []>} : vector<16x4xf32>, vector<4x16xf32>, vector<16x16xf32> -> vector<16x16xf32>
    %c0_307 = arith.constant 0 : index
    %c1_308 = arith.constant 1 : index
    %c0_309 = arith.constant 0 : index
    %c0_310 = arith.constant 0 : index
    %246 = vector.load %arg2[%c0_307, %c1_308, %c0_309, %c0_310] : memref<1x3x16x16xf32, #tpu.memory_space<vmem>>, vector<1x1x16x16xf32>
    %247 = vector.shape_cast %246 : vector<1x1x16x16xf32> to vector<16x16xf32>
    %cst_311 = arith.constant 1.000000e+00 : f32
    %248 = vector.broadcast %cst_311 : f32 to vector<16x16xf32>
    %249 = arith.mulf %248, %247 : vector<16x16xf32>
    %250 = arith.addf %245, %249 : vector<16x16xf32>
    %c0_312 = arith.constant 0 : index
    %c1_313 = arith.constant 1 : index
    %c0_314 = arith.constant 0 : index
    %c0_315 = arith.constant 0 : index
    %251 = vector.load %arg16[%c0_312, %c1_313, %c0_314, %c0_315] : memref<1x3x16x16xf32, #tpu.memory_space<vmem>>, vector<1x1x16x16xf32>
    %252 = vector.shape_cast %251 : vector<1x1x16x16xf32> to vector<16x16xf32>
    %253 = vector.shape_cast %250 : vector<16x16xf32> to vector<1x1x16x16xf32>
    tpu.vector_store %arg16[%c0_312, %c1_313, %c0_314, %c0_315], %253 {strides = array<i32>} : memref<1x3x16x16xf32, #tpu.memory_space<vmem>>, vector<1x1x16x16xf32>,
    %c2_316 = arith.constant 2 : index
    %c0_317 = arith.constant 0 : index
    %c0_318 = arith.constant 0 : index
    %254 = vector.load %arg22[%c2_316, %c0_317, %c0_318] : memref<3x4x4xf32, #tpu.memory_space<vmem>>, vector<1x4x4xf32>
    %255 = vector.shape_cast %254 : vector<1x4x4xf32> to vector<4x4xf32>
    %cst_319 = arith.constant dense<0.000000e+00> : vector<16x4xf32>
    %256 = tpu.matmul %228, %255, %cst_319 {dimension_numbers = #tpu.dot_dimension_numbers<[1], [0], [0], [1], [0, 0, 1, 1], [], []>} : vector<16x4xf32>, vector<4x4xf32>, vector<16x4xf32> -> vector<16x4xf32>
    %cst_320 = arith.constant dense<0.000000e+00> : vector<16x16xf32>
    %257 = tpu.matmul %256, %229, %cst_320 {dimension_numbers = #tpu.dot_dimension_numbers<[1], [0], [0], [1], [0, 0, 1, 1], [], []>} : vector<16x4xf32>, vector<4x16xf32>, vector<16x16xf32> -> vector<16x16xf32>
    %c0_321 = arith.constant 0 : index
    %c2_322 = arith.constant 2 : index
    %c0_323 = arith.constant 0 : index
    %c0_324 = arith.constant 0 : index
    %258 = vector.load %arg2[%c0_321, %c2_322, %c0_323, %c0_324] : memref<1x3x16x16xf32, #tpu.memory_space<vmem>>, vector<1x1x16x16xf32>
    %259 = vector.shape_cast %258 : vector<1x1x16x16xf32> to vector<16x16xf32>
    %cst_325 = arith.constant 1.000000e+00 : f32
    %260 = vector.broadcast %cst_325 : f32 to vector<16x16xf32>
    %261 = arith.mulf %260, %259 : vector<16x16xf32>
    %262 = arith.addf %257, %261 : vector<16x16xf32>
    %c0_326 = arith.constant 0 : index
    %c2_327 = arith.constant 2 : index
    %c0_328 = arith.constant 0 : index
    %c0_329 = arith.constant 0 : index
    %263 = vector.load %arg16[%c0_326, %c2_327, %c0_328, %c0_329] : memref<1x3x16x16xf32, #tpu.memory_space<vmem>>, vector<1x1x16x16xf32>
    %264 = vector.shape_cast %263 : vector<1x1x16x16xf32> to vector<16x16xf32>
    %265 = vector.shape_cast %262 : vector<16x16xf32> to vector<1x1x16x16xf32>
    tpu.vector_store %arg16[%c0_326, %c2_327, %c0_328, %c0_329], %265 {strides = array<i32>} : memref<1x3x16x16xf32, #tpu.memory_space<vmem>>, vector<1x1x16x16xf32>,
    return
  }
  func.func @transform_0(%arg0: i32) -> (i32, i32, i32, i32) {
    %c0_i32 = arith.constant 0 : i32
    %c0_i32_0 = arith.constant 0 : i32
    %c0_i32_1 = arith.constant 0 : i32
    %c0_i32_2 = arith.constant 0 : i32
    return %arg0, %c0_i32, %c0_i32_0, %c0_i32_1 : i32, i32, i32, i32
  }
  func.func @transform_1(%arg0: i32) -> (i32, i32, i32, i32) {
    %c0_i32 = arith.constant 0 : i32
    %c0_i32_0 = arith.constant 0 : i32
    %c0_i32_1 = arith.constant 0 : i32
    %c0_i32_2 = arith.constant 0 : i32
    return %arg0, %c0_i32, %c0_i32_0, %c0_i32_1 : i32, i32, i32, i32
  }
  func.func @transform_2(%arg0: i32) -> (i32, i32) {
    %c0_i32 = arith.constant 0 : i32
    %c0_i32_0 = arith.constant 0 : i32
    %c0_i32_1 = arith.constant 0 : i32
    return %c0_i32, %c0_i32_0 : i32, i32
  }
  func.func @transform_3(%arg0: i32) -> (i32, i32) {
    %c0_i32 = arith.constant 0 : i32
    %c0_i32_0 = arith.constant 0 : i32
    %c0_i32_1 = arith.constant 0 : i32
    return %c0_i32, %c0_i32_0 : i32, i32
  }
  func.func @transform_4(%arg0: i32) -> (i32, i32) {
    %c0_i32 = arith.constant 0 : i32
    %c0_i32_0 = arith.constant 0 : i32
    %c0_i32_1 = arith.constant 0 : i32
    return %c0_i32, %c0_i32_0 : i32, i32
  }
  func.func @transform_5(%arg0: i32) -> (i32, i32) {
    %c0_i32 = arith.constant 0 : i32
    %c0_i32_0 = arith.constant 0 : i32
    %c0_i32_1 = arith.constant 0 : i32
    return %c0_i32, %c0_i32_0 : i32, i32
  }
  func.func @transform_6(%arg0: i32) -> (i32, i32, i32) {
    %c0_i32 = arith.constant 0 : i32
    %c0_i32_0 = arith.constant 0 : i32
    %c0_i32_1 = arith.constant 0 : i32
    %c0_i32_2 = arith.constant 0 : i32
    return %c0_i32, %c0_i32_0, %c0_i32_1 : i32, i32, i32
  }
  func.func @transform_7(%arg0: i32) -> (i32, i32, i32) {
    %c0_i32 = arith.constant 0 : i32
    %c0_i32_0 = arith.constant 0 : i32
    %c0_i32_1 = arith.constant 0 : i32
    %c0_i32_2 = arith.constant 0 : i32
    return %c0_i32, %c0_i32_0, %c0_i32_1 : i32, i32, i32
  }
  func.func @transform_8(%arg0: i32) -> (i32, i32, i32) {
    %c0_i32 = arith.constant 0 : i32
    %c0_i32_0 = arith.constant 0 : i32
    %c0_i32_1 = arith.constant 0 : i32
    %c0_i32_2 = arith.constant 0 : i32
    return %c0_i32, %c0_i32_0, %c0_i32_1 : i32, i32, i32
  }
  func.func @transform_9(%arg0: i32) -> (i32, i32, i32) {
    %c0_i32 = arith.constant 0 : i32
    %c0_i32_0 = arith.constant 0 : i32
    %c0_i32_1 = arith.constant 0 : i32
    %c0_i32_2 = arith.constant 0 : i32
    return %c0_i32, %c0_i32_0, %c0_i32_1 : i32, i32, i32
  }
  func.func @transform_10(%arg0: i32) -> (i32, i32) {
    %c0_i32 = arith.constant 0 : i32
    %c0_i32_0 = arith.constant 0 : i32
    %c0_i32_1 = arith.constant 0 : i32
    return %c0_i32, %c0_i32_0 : i32, i32
  }
  func.func @transform_11(%arg0: i32) -> (i32, i32) {
    %c0_i32 = arith.constant 0 : i32
    %c0_i32_0 = arith.constant 0 : i32
    %c0_i32_1 = arith.constant 0 : i32
    return %c0_i32, %c0_i32_0 : i32, i32
  }
  func.func @transform_12(%arg0: i32) -> (i32, i32) {
    %c0_i32 = arith.constant 0 : i32
    %c0_i32_0 = arith.constant 0 : i32
    %c0_i32_1 = arith.constant 0 : i32
    return %c0_i32, %c0_i32_0 : i32, i32
  }
  func.func @transform_13(%arg0: i32) -> (i32, i32) {
    %c0_i32 = arith.constant 0 : i32
    %c0_i32_0 = arith.constant 0 : i32
    %c0_i32_1 = arith.constant 0 : i32
    return %c0_i32, %c0_i32_0 : i32, i32
  }
  func.func @transform_14(%arg0: i32) -> (i32, i32) {
    %c0_i32 = arith.constant 0 : i32
    %c0_i32_0 = arith.constant 0 : i32
    %c0_i32_1 = arith.constant 0 : i32
    return %c0_i32, %c0_i32_0 : i32, i32
  }
  func.func @transform_15(%arg0: i32) -> (i32, i32, i32, i32) {
    %c0_i32 = arith.constant 0 : i32
    %c0_i32_0 = arith.constant 0 : i32
    %c0_i32_1 = arith.constant 0 : i32
    %c0_i32_2 = arith.constant 0 : i32
    return %arg0, %c0_i32, %c0_i32_0, %c0_i32_1 : i32, i32, i32, i32
  }
}

</mosaic_0001>

<llo_original>
// kernel: deco_forward.1
$region0: #{deco_forward.1}
  #allocation0 [shape = 'u32[]', space=smem, size = 0x4, offset = 0x4, fixed_abs, tag = 'smem constant byte address 0x4 - core index']
  #allocation1 [shape = 'u32[72,128]{1,0:T(1,128)}', space=vmem, size = 0x9000, scoped, tag = 'internal scratch']
  #allocation2 [shape = 'f32[75,78]{1,0:T(8,128)}', space=vmem, size = 0xa000, scoped, tag = 'scratch operand']
  #allocation3 [shape = 'f32[8,100]{1,0:T(8,128)}', space=vmem, size = 0x1000, scoped, tag = 'scratch operand']
  #allocation4 [shape = 'f32[8,36]{1,0:T(8,128)}', space=vmem, size = 0x1000, scoped, tag = 'scratch operand']
  #allocation5 [shape = 'f32[8,36]{1,0:T(8,128)}', space=vmem, size = 0x1000, scoped, tag = 'scratch operand']
  #allocation6 [shape = 'f32[72,22]{1,0:T(8,128)}', space=vmem, size = 0x9000, scoped, tag = 'scratch operand']
  #allocation7 [shape = 'f32[3,4,4]{2,1,0:T(4,128)}', space=vmem, size = 0x1800, scoped, tag = 'scratch operand']
  %s0 = inlined_call_operand.vmem [shape: f32[2,4,3,100], index: 0, kind: input, shape index: {}]
  %s1 = inlined_call_operand.vmem [shape: f32[2,3,16,16], index: 1, kind: input, shape index: {}]
  %s2 = inlined_call_operand.vmem [shape: f32[8,75], index: 2, kind: input, shape index: {}]
  %s3 = inlined_call_operand.vmem [shape: f32[8,1], index: 3, kind: input, shape index: {}]
  %s4 = inlined_call_operand.vmem [shape: f32[8,4], index: 4, kind: input, shape index: {}]
  %s5 = inlined_call_operand.vmem [shape: f32[1,78], index: 5, kind: input, shape index: {}]
  %s6 = inlined_call_operand.vmem [shape: f32[1,8,72], index: 6, kind: input, shape index: {}]
  %s7 = inlined_call_operand.vmem [shape: f32[1,8,1], index: 7, kind: input, shape index: {}]
  %s8 = inlined_call_operand.vmem [shape: f32[1,8,72], index: 8, kind: input, shape index: {}]
  %s9 = inlined_call_operand.vmem [shape: f32[1,8,1], index: 9, kind: input, shape index: {}]
  %s10 = inlined_call_operand.vmem [shape: f32[1,22], index: 10, kind: input, shape index: {}]
  %s11 = inlined_call_operand.vmem [shape: f32[3,8], index: 11, kind: input, shape index: {}]
  %s12 = inlined_call_operand.vmem [shape: f32[3,1], index: 12, kind: input, shape index: {}]
  %s13 = inlined_call_operand.vmem [shape: f32[16,4], index: 13, kind: input, shape index: {}]
  %s14 = inlined_call_operand.vmem [shape: f32[4,16], index: 14, kind: input, shape index: {}]
  %s15 = inlined_call_operand.hbm [shape: f32[2,3,16,16], index: 15, kind: output, shape index: {}]
  %s16 = sld [smem:[#allocation0]]
  $region93: #{deco_forward.1} parent=0
    _
  %s18 = ssub.s32 1, %s16
  %s19 = scalar_select 0, %s18, %s16
  $region1: #{deco_forward.1} parent=0
    #allocation8 [shape = 'u8[49152]{0}', space=vmem, size = 0xc000, scoped, tag = 'output window, operand 0']
    #allocation9 [shape = 's32[2]{0}', space=sflag, size = 0x8, scoped, tag = 'scoped memory for deco_forward.1']
    %20 = vsyncpa [#allocation9], 0
    %s21 = scalar_lea.sflag [#allocation9], 1
    %22 = vsyncpa %s21, 0
    loop: start=0, step=1, limit=4
    $region2: #{deco_forward.1} parent=1 // loop_pre_header
      _
    $region3: #{deco_forward.1} parent=1 // loop_header
      %s24 = sphi 0, %s28
      %p25 = scmp.ge.s32.totalorder %s24, 4
      %s34 = sphi 0, %s36
      %s37 = sphi 0, %s34
      %s38 = sphi 0, %s37
      %s54 = sphi 0, %s38
      %s60 = sphi 0, %s62
      %s63 = sphi 0, %s60
      %s64 = sphi 0, %s63
      %s80 = sphi 0, %s64
      %s84 = sphi 0, %s84
      %s86 = sphi 0, %s84
      %s87 = sphi 0, %s86
      %s101 = sphi 0, %s87
      %s105 = sphi 0, %s105
      %s107 = sphi 0, %s105
      %s108 = sphi 0, %s107
      %s122 = sphi 0, %s108
      %s126 = sphi 0, %s126
      %s128 = sphi 0, %s126
      %s129 = sphi 0, %s128
      %s143 = sphi 0, %s129
      %s147 = sphi 0, %s147
      %s149 = sphi 0, %s147
      %s150 = sphi 0, %s149
      %s164 = sphi 0, %s150
      %s168 = sphi 0, %s168
      %s170 = sphi 0, %s168
      %s171 = sphi 0, %s170
      %s185 = sphi 0, %s171
      %s189 = sphi 0, %s189
      %s191 = sphi 0, %s189
      %s192 = sphi 0, %s191
      %s206 = sphi 0, %s192
      %s210 = sphi 0, %s210
      %s212 = sphi 0, %s210
      %s213 = sphi 0, %s212
      %s227 = sphi 0, %s213
      %s231 = sphi 0, %s231
      %s233 = sphi 0, %s231
      %s234 = sphi 0, %s233
      %s248 = sphi 0, %s234
      %s252 = sphi 0, %s252
      %s254 = sphi 0, %s252
      %s255 = sphi 0, %s254
      %s269 = sphi 0, %s255
      %s273 = sphi 0, %s273
      %s275 = sphi 0, %s273
      %s276 = sphi 0, %s275
      %s290 = sphi 0, %s276
      %s294 = sphi 0, %s294
      %s296 = sphi 0, %s294
      %s297 = sphi 0, %s296
      %s311 = sphi 0, %s297
      %s315 = sphi 0, %s315
      %s317 = sphi 0, %s315
      %s318 = sphi 0, %s317
      %s332 = sphi 0, %s318
      %s336 = sphi 0, %s336
      %s338 = sphi 0, %s336
      %s339 = sphi 0, %s338
      %s353 = sphi 0, %s339
      %s359 = sphi 0, %s361
      %s362 = sphi 0, %s359
      %s363 = sphi 0, %s362
      %s379 = sphi 0, %s363
    $region4: #{deco_forward.1} parent=1 // loop_header_branch
      %27 = sbr.rel (%p25) target = $region8
    $region5: #{deco_forward.1} parent=1 // loop_body
      %s29 = ssub.s32 %s24, 1
      %s30 = ssub.s32 %s24, 2
      %s31 = sadd.s32 %s24, 1
      %s32 = ssub.s32 %s24, %s31
      %p33 = scmp.eq.s32.totalorder %s32, 0
      %s35 = sadd.s32 %s34, 1
      %s36 = scalar_select %p33, %s34, %s35
      %p39 = pneg %p33
      %p40 = scmp.eq.s32.totalorder %s24, 1
      %p41 = por %p39, %p40
      %p42 = scmp.ne.s32.totalorder %s34, %s37
      %p43 = scmp.eq.s32.totalorder %s24, 0
      %p44 = por %p42, %p43
      %p45 = scmp.ne.s32.totalorder %s34, %s37
      %p46 = scmp.eq.s32.totalorder %s29, 1
      %p47 = por %p45, %p46
      %p48 = scmp.ne.s32.totalorder %s37, %s38
      %p49 = scmp.eq.s32.totalorder %s29, 0
      %p50 = por %p48, %p49
      %p51 = scmp.ne.s32.totalorder %s37, %s38
      %p52 = scmp.eq.s32.totalorder %s30, 1
      %p53 = por %p51, %p52
      %p55 = scmp.ne.s32.totalorder %s38, %s54
      %p56 = scmp.eq.s32.totalorder %s30, 0
      %p57 = por %p55, %p56
      %s58 = ssub.s32 %s24, %s31
      %p59 = scmp.eq.s32.totalorder %s58, 0
      %s61 = sadd.s32 %s60, 1
      %s62 = scalar_select %p59, %s60, %s61
      %p65 = pneg %p59
      %p66 = scmp.eq.s32.totalorder %s24, 1
      %p67 = por %p65, %p66
      %p68 = scmp.ne.s32.totalorder %s60, %s63
      %p69 = scmp.eq.s32.totalorder %s24, 0
      %p70 = por %p68, %p69
      %p71 = scmp.ne.s32.totalorder %s60, %s63
      %p72 = scmp.eq.s32.totalorder %s29, 1
      %p73 = por %p71, %p72
      %p74 = scmp.ne.s32.totalorder %s63, %s64
      %p75 = scmp.eq.s32.totalorder %s29, 0
      %p76 = por %p74, %p75
      %p77 = scmp.ne.s32.totalorder %s63, %s64
      %p78 = scmp.eq.s32.totalorder %s30, 1
      %p79 = por %p77, %p78
      %p81 = scmp.ne.s32.totalorder %s64, %s80
      %p82 = scmp.eq.s32.totalorder %s30, 0
      %p83 = por %p81, %p82
      %s85 = sadd.s32 %s84, 1
      %p88 = scmp.eq.s32.totalorder %s24, 1
      %p89 = scmp.ne.s32.totalorder %s84, %s86
      %p90 = scmp.eq.s32.totalorder %s24, 0
      %p91 = por %p89, %p90
      %p92 = scmp.ne.s32.totalorder %s84, %s86
      %p93 = scmp.eq.s32.totalorder %s29, 1
      %p94 = por %p92, %p93
      %p95 = scmp.ne.s32.totalorder %s86, %s87
      %p96 = scmp.eq.s32.totalorder %s29, 0
      %p97 = por %p95, %p96
      %p98 = scmp.ne.s32.totalorder %s86, %s87
      %p99 = scmp.eq.s32.totalorder %s30, 1
      %p100 = por %p98, %p99
      %p102 = scmp.ne.s32.totalorder %s87, %s101
      %p103 = scmp.eq.s32.totalorder %s30, 0
      %p104 = por %p102, %p103
      %s106 = sadd.s32 %s105, 1
      %p109 = scmp.eq.s32.totalorder %s24, 1
      %p110 = scmp.ne.s32.totalorder %s105, %s107
      %p111 = scmp.eq.s32.totalorder %s24, 0
      %p112 = por %p110, %p111
      %p113 = scmp.ne.s32.totalorder %s105, %s107
      %p114 = scmp.eq.s32.totalorder %s29, 1
      %p115 = por %p113, %p114
      %p116 = scmp.ne.s32.totalorder %s107, %s108
      %p117 = scmp.eq.s32.totalorder %s29, 0
      %p118 = por %p116, %p117
      %p119 = scmp.ne.s32.totalorder %s107, %s108
      %p120 = scmp.eq.s32.totalorder %s30, 1
      %p121 = por %p119, %p120
      %p123 = scmp.ne.s32.totalorder %s108, %s122
      %p124 = scmp.eq.s32.totalorder %s30, 0
      %p125 = por %p123, %p124
      %s127 = sadd.s32 %s126, 1
      %p130 = scmp.eq.s32.totalorder %s24, 1
      %p131 = scmp.ne.s32.totalorder %s126, %s128
      %p132 = scmp.eq.s32.totalorder %s24, 0
      %p133 = por %p131, %p132
      %p134 = scmp.ne.s32.totalorder %s126, %s128
      %p135 = scmp.eq.s32.totalorder %s29, 1
      %p136 = por %p134, %p135
      %p137 = scmp.ne.s32.totalorder %s128, %s129
      %p138 = scmp.eq.s32.totalorder %s29, 0
      %p139 = por %p137, %p138
      %p140 = scmp.ne.s32.totalorder %s128, %s129
      %p141 = scmp.eq.s32.totalorder %s30, 1
      %p142 = por %p140, %p141
      %p144 = scmp.ne.s32.totalorder %s129, %s143
      %p145 = scmp.eq.s32.totalorder %s30, 0
      %p146 = por %p144, %p145
      %s148 = sadd.s32 %s147, 1
      %p151 = scmp.eq.s32.totalorder %s24, 1
      %p152 = scmp.ne.s32.totalorder %s147, %s149
      %p153 = scmp.eq.s32.totalorder %s24, 0
      %p154 = por %p152, %p153
      %p155 = scmp.ne.s32.totalorder %s147, %s149
      %p156 = scmp.eq.s32.totalorder %s29, 1
      %p157 = por %p155, %p156
      %p158 = scmp.ne.s32.totalorder %s149, %s150
      %p159 = scmp.eq.s32.totalorder %s29, 0
      %p160 = por %p158, %p159
      %p161 = scmp.ne.s32.totalorder %s149, %s150
      %p162 = scmp.eq.s32.totalorder %s30, 1
      %p163 = por %p161, %p162
      %p165 = scmp.ne.s32.totalorder %s150, %s164
      %p166 = scmp.eq.s32.totalorder %s30, 0
      %p167 = por %p165, %p166
      %s169 = sadd.s32 %s168, 1
      %p172 = scmp.eq.s32.totalorder %s24, 1
      %p173 = scmp.ne.s32.totalorder %s168, %s170
      %p174 = scmp.eq.s32.totalorder %s24, 0
      %p175 = por %p173, %p174
      %p176 = scmp.ne.s32.totalorder %s168, %s170
      %p177 = scmp.eq.s32.totalorder %s29, 1
      %p178 = por %p176, %p177
      %p179 = scmp.ne.s32.totalorder %s170, %s171
      %p180 = scmp.eq.s32.totalorder %s29, 0
      %p181 = por %p179, %p180
      %p182 = scmp.ne.s32.totalorder %s170, %s171
      %p183 = scmp.eq.s32.totalorder %s30, 1
      %p184 = por %p182, %p183
      %p186 = scmp.ne.s32.totalorder %s171, %s185
      %p187 = scmp.eq.s32.totalorder %s30, 0
      %p188 = por %p186, %p187
      %s190 = sadd.s32 %s189, 1
      %p193 = scmp.eq.s32.totalorder %s24, 1
      %p194 = scmp.ne.s32.totalorder %s189, %s191
      %p195 = scmp.eq.s32.totalorder %s24, 0
      %p196 = por %p194, %p195
      %p197 = scmp.ne.s32.totalorder %s189, %s191
      %p198 = scmp.eq.s32.totalorder %s29, 1
      %p199 = por %p197, %p198
      %p200 = scmp.ne.s32.totalorder %s191, %s192
      %p201 = scmp.eq.s32.totalorder %s29, 0
      %p202 = por %p200, %p201
      %p203 = scmp.ne.s32.totalorder %s191, %s192
      %p204 = scmp.eq.s32.totalorder %s30, 1
      %p205 = por %p203, %p204
      %p207 = scmp.ne.s32.totalorder %s192, %s206
      %p208 = scmp.eq.s32.totalorder %s30, 0
      %p209 = por %p207, %p208
      %s211 = sadd.s32 %s210, 1
      %p214 = scmp.eq.s32.totalorder %s24, 1
      %p215 = scmp.ne.s32.totalorder %s210, %s212
      %p216 = scmp.eq.s32.totalorder %s24, 0
      %p217 = por %p215, %p216
      %p218 = scmp.ne.s32.totalorder %s210, %s212
      %p219 = scmp.eq.s32.totalorder %s29, 1
      %p220 = por %p218, %p219
      %p221 = scmp.ne.s32.totalorder %s212, %s213
      %p222 = scmp.eq.s32.totalorder %s29, 0
      %p223 = por %p221, %p222
      %p224 = scmp.ne.s32.totalorder %s212, %s213
      %p225 = scmp.eq.s32.totalorder %s30, 1
      %p226 = por %p224, %p225
      %p228 = scmp.ne.s32.totalorder %s213, %s227
      %p229 = scmp.eq.s32.totalorder %s30, 0
      %p230 = por %p228, %p229
      %s232 = sadd.s32 %s231, 1
      %p235 = scmp.eq.s32.totalorder %s24, 1
      %p236 = scmp.ne.s32.totalorder %s231, %s233
      %p237 = scmp.eq.s32.totalorder %s24, 0
      %p238 = por %p236, %p237
      %p239 = scmp.ne.s32.totalorder %s231, %s233
      %p240 = scmp.eq.s32.totalorder %s29, 1
      %p241 = por %p239, %p240
      %p242 = scmp.ne.s32.totalorder %s233, %s234
      %p243 = scmp.eq.s32.totalorder %s29, 0
      %p244 = por %p242, %p243
      %p245 = scmp.ne.s32.totalorder %s233, %s234
      %p246 = scmp.eq.s32.totalorder %s30, 1
      %p247 = por %p245, %p246
      %p249 = scmp.ne.s32.totalorder %s234, %s248
      %p250 = scmp.eq.s32.totalorder %s30, 0
      %p251 = por %p249, %p250
      %s253 = sadd.s32 %s252, 1
      %p256 = scmp.eq.s32.totalorder %s24, 1
      %p257 = scmp.ne.s32.totalorder %s252, %s254
      %p258 = scmp.eq.s32.totalorder %s24, 0
      %p259 = por %p257, %p258
      %p260 = scmp.ne.s32.totalorder %s252, %s254
      %p261 = scmp.eq.s32.totalorder %s29, 1
      %p262 = por %p260, %p261
      %p263 = scmp.ne.s32.totalorder %s254, %s255
      %p264 = scmp.eq.s32.totalorder %s29, 0
      %p265 = por %p263, %p264
      %p266 = scmp.ne.s32.totalorder %s254, %s255
      %p267 = scmp.eq.s32.totalorder %s30, 1
      %p268 = por %p266, %p267
      %p270 = scmp.ne.s32.totalorder %s255, %s269
      %p271 = scmp.eq.s32.totalorder %s30, 0
      %p272 = por %p270, %p271
      %s274 = sadd.s32 %s273, 1
      %p277 = scmp.eq.s32.totalorder %s24, 1
      %p278 = scmp.ne.s32.totalorder %s273, %s275
      %p279 = scmp.eq.s32.totalorder %s24, 0
      %p280 = por %p278, %p279
      %p281 = scmp.ne.s32.totalorder %s273, %s275
      %p282 = scmp.eq.s32.totalorder %s29, 1
      %p283 = por %p281, %p282
      %p284 = scmp.ne.s32.totalorder %s275, %s276
      %p285 = scmp.eq.s32.totalorder %s29, 0
      %p286 = por %p284, %p285
      %p287 = scmp.ne.s32.totalorder %s275, %s276
      %p288 = scmp.eq.s32.totalorder %s30, 1
      %p289 = por %p287, %p288
      %p291 = scmp.ne.s32.totalorder %s276, %s290
      %p292 = scmp.eq.s32.totalorder %s30, 0
      %p293 = por %p291, %p292
      %s295 = sadd.s32 %s294, 1
      %p298 = scmp.eq.s32.totalorder %s24, 1
      %p299 = scmp.ne.s32.totalorder %s294, %s296
      %p300 = scmp.eq.s32.totalorder %s24, 0
      %p301 = por %p299, %p300
      %p302 = scmp.ne.s32.totalorder %s294, %s296
      %p303 = scmp.eq.s32.totalorder %s29, 1
      %p304 = por %p302, %p303
      %p305 = scmp.ne.s32.totalorder %s296, %s297
      %p306 = scmp.eq.s32.totalorder %s29, 0
      %p307 = por %p305, %p306
      %p308 = scmp.ne.s32.totalorder %s296, %s297
      %p309 = scmp.eq.s32.totalorder %s30, 1
      %p310 = por %p308, %p309
      %p312 = scmp.ne.s32.totalorder %s297, %s311
      %p313 = scmp.eq.s32.totalorder %s30, 0
      %p314 = por %p312, %p313
      %s316 = sadd.s32 %s315, 1
      %p319 = scmp.eq.s32.totalorder %s24, 1
      %p320 = scmp.ne.s32.totalorder %s315, %s317
      %p321 = scmp.eq.s32.totalorder %s24, 0
      %p322 = por %p320, %p321
      %p323 = scmp.ne.s32.totalorder %s315, %s317
      %p324 = scmp.eq.s32.totalorder %s29, 1
      %p325 = por %p323, %p324
      %p326 = scmp.ne.s32.totalorder %s317, %s318
      %p327 = scmp.eq.s32.totalorder %s29, 0
      %p328 = por %p326, %p327
      %p329 = scmp.ne.s32.totalorder %s317, %s318
      %p330 = scmp.eq.s32.totalorder %s30, 1
      %p331 = por %p329, %p330
      %p333 = scmp.ne.s32.totalorder %s318, %s332
      %p334 = scmp.eq.s32.totalorder %s30, 0
      %p335 = por %p333, %p334
      %s337 = sadd.s32 %s336, 1
      %p340 = scmp.eq.s32.totalorder %s24, 1
      %p341 = scmp.ne.s32.totalorder %s336, %s338
      %p342 = scmp.eq.s32.totalorder %s24, 0
      %p343 = por %p341, %p342
      %p344 = scmp.ne.s32.totalorder %s336, %s338
      %p345 = scmp.eq.s32.totalorder %s29, 1
      %p346 = por %p344, %p345
      %p347 = scmp.ne.s32.totalorder %s338, %s339
      %p348 = scmp.eq.s32.totalorder %s29, 0
      %p349 = por %p347, %p348
      %p350 = scmp.ne.s32.totalorder %s338, %s339
      %p351 = scmp.eq.s32.totalorder %s30, 1
      %p352 = por %p350, %p351
      %p354 = scmp.ne.s32.totalorder %s339, %s353
      %p355 = scmp.eq.s32.totalorder %s30, 0
      %p356 = por %p354, %p355
      %s357 = ssub.s32 %s24, %s31
      %p358 = scmp.eq.s32.totalorder %s357, 0
      %s360 = sadd.s32 %s359, 1
      %s361 = scalar_select %p358, %s359, %s360
      %p364 = pneg %p358
      %p365 = scmp.eq.s32.totalorder %s24, 1
      %p366 = por %p364, %p365
      %p367 = scmp.ne.s32.totalorder %s359, %s362
      %p368 = scmp.eq.s32.totalorder %s24, 0
      %p369 = por %p367, %p368
      %p370 = scmp.ne.s32.totalorder %s359, %s362
      %p371 = scmp.eq.s32.totalorder %s29, 1
      %p372 = por %p370, %p371
      %p373 = scmp.ne.s32.totalorder %s362, %s363
      %p374 = scmp.eq.s32.totalorder %s29, 0
      %p375 = por %p373, %p374
      %p376 = scmp.ne.s32.totalorder %s362, %s363
      %p377 = scmp.eq.s32.totalorder %s30, 1
      %p378 = por %p376, %p377
      %p380 = scmp.ne.s32.totalorder %s363, %s379
      %p381 = scmp.eq.s32.totalorder %s30, 0
      %p382 = por %p380, %p381
      %p383 = scmp.le.s32.totalorder 1, %s24
      %p384 = scmp.lt.s32.totalorder %s24, 3
      %p385 = pnand %p383, %p384
      %p386 = pneg %p385
      // Predicated region
      $region9: #{deco_forward.1} parent=5 // pred_check
        _
      $region10: #{deco_forward.1} parent=5 // pred_check_branch
        %388 = sbr.rel (%p385) target = $region12
      $region11: #{deco_forward.1} parent=5 // pred_region
        %s389 = ssub.s32 %s24, 1
        // Predicated region
        $region13: #{deco_forward.1} parent=11 // pred_check
          %p390 = pneg %p97
        $region14: #{deco_forward.1} parent=11 // pred_check_branch
          %392 = sbr.rel (%p390) target = $region16
        $region15: #{deco_forward.1} parent=11 // pred_region
          _
        $region16: #{deco_forward.1} parent=11 // pred_fallthru
          _
        // Predicated region
        $region17: #{deco_forward.1} parent=11 // pred_check
          %p393 = pneg %p118
        $region18: #{deco_forward.1} parent=11 // pred_check_branch
          %395 = sbr.rel (%p393) target = $region20
        $region19: #{deco_forward.1} parent=11 // pred_region
          _
        $region20: #{deco_forward.1} parent=11 // pred_fallthru
          _
        // Predicated region
        $region21: #{deco_forward.1} parent=11 // pred_check
          %p396 = pneg %p139
        $region22: #{deco_forward.1} parent=11 // pred_check_branch
          %398 = sbr.rel (%p396) target = $region24
        $region23: #{deco_forward.1} parent=11 // pred_region
          _
        $region24: #{deco_forward.1} parent=11 // pred_fallthru
          _
        // Predicated region
        $region25: #{deco_forward.1} parent=11 // pred_check
          %p399 = pneg %p160
        $region26: #{deco_forward.1} parent=11 // pred_check_branch
          %401 = sbr.rel (%p399) target = $region28
        $region27: #{deco_forward.1} parent=11 // pred_region
          _
        $region28: #{deco_forward.1} parent=11 // pred_fallthru
          _
        // Predicated region
        $region29: #{deco_forward.1} parent=11 // pred_check
          %p402 = pneg %p181
        $region30: #{deco_forward.1} parent=11 // pred_check_branch
          %404 = sbr.rel (%p402) target = $region32
        $region31: #{deco_forward.1} parent=11 // pred_region
          _
        $region32: #{deco_forward.1} parent=11 // pred_fallthru
          _
        // Predicated region
        $region33: #{deco_forward.1} parent=11 // pred_check
          %p405 = pneg %p202
        $region34: #{deco_forward.1} parent=11 // pred_check_branch
          %407 = sbr.rel (%p405) target = $region36
        $region35: #{deco_forward.1} parent=11 // pred_region
          _
        $region36: #{deco_forward.1} parent=11 // pred_fallthru
          _
        // Predicated region
        $region37: #{deco_forward.1} parent=11 // pred_check
          %p408 = pneg %p223
        $region38: #{deco_forward.1} parent=11 // pred_check_branch
          %410 = sbr.rel (%p408) target = $region40
        $region39: #{deco_forward.1} parent=11 // pred_region
          _
        $region40: #{deco_forward.1} parent=11 // pred_fallthru
          _
        // Predicated region
        $region41: #{deco_forward.1} parent=11 // pred_check
          %p411 = pneg %p244
        $region42: #{deco_forward.1} parent=11 // pred_check_branch
          %413 = sbr.rel (%p411) target = $region44
        $region43: #{deco_forward.1} parent=11 // pred_region
          _
        $region44: #{deco_forward.1} parent=11 // pred_fallthru
          _
        // Predicated region
        $region45: #{deco_forward.1} parent=11 // pred_check
          %p414 = pneg %p265
        $region46: #{deco_forward.1} parent=11 // pred_check_branch
          %416 = sbr.rel (%p414) target = $region48
        $region47: #{deco_forward.1} parent=11 // pred_region
          _
        $region48: #{deco_forward.1} parent=11 // pred_fallthru
          _
        // Predicated region
        $region49: #{deco_forward.1} parent=11 // pred_check
          %p417 = pneg %p286
        $region50: #{deco_forward.1} parent=11 // pred_check_branch
          %419 = sbr.rel (%p417) target = $region52
        $region51: #{deco_forward.1} parent=11 // pred_region
          _
        $region52: #{deco_forward.1} parent=11 // pred_fallthru
          _
        // Predicated region
        $region53: #{deco_forward.1} parent=11 // pred_check
          %p420 = pneg %p307
        $region54: #{deco_forward.1} parent=11 // pred_check_branch
          %422 = sbr.rel (%p420) target = $region56
        $region55: #{deco_forward.1} parent=11 // pred_region
          _
        $region56: #{deco_forward.1} parent=11 // pred_fallthru
          _
        // Predicated region
        $region57: #{deco_forward.1} parent=11 // pred_check
          %p423 = pneg %p328
        $region58: #{deco_forward.1} parent=11 // pred_check_branch
          %425 = sbr.rel (%p423) target = $region60
        $region59: #{deco_forward.1} parent=11 // pred_region
          _
        $region60: #{deco_forward.1} parent=11 // pred_fallthru
          _
        // Predicated region
        $region61: #{deco_forward.1} parent=11 // pred_check
          %p426 = pneg %p349
        $region62: #{deco_forward.1} parent=11 // pred_check_branch
          %428 = sbr.rel (%p426) target = $region64
        $region63: #{deco_forward.1} parent=11 // pred_region
          _
        $region64: #{deco_forward.1} parent=11 // pred_fallthru
          _
      $region12: #{deco_forward.1} parent=5 // pred_fallthru
        _
      %p429 = scmp.lt.s32.totalorder %s24, 2
      // Predicated region
      $region65: #{deco_forward.1} parent=5 // pred_check
        %p430 = pneg %p429
      $region66: #{deco_forward.1} parent=5 // pred_check_branch
        %432 = sbr.rel (%p430) target = $region68
      $region67: #{deco_forward.1} parent=5 // pred_region
        // Predicated region
        $region69: #{deco_forward.1} parent=67 // pred_check
          %p433 = pneg %p44
        $region70: #{deco_forward.1} parent=67 // pred_check_branch
          %435 = sbr.rel (%p433) target = $region72
        $region71: #{deco_forward.1} parent=67 // pred_region
          %p436 = scmp.lt.s32.totalorder %s24, 1
          %s437 = scalar_select %p436, %s24, 1
          %s438 = smul.addr %s437, 4
          %s439 = smul.addr %s438, 4
          %s440 = scalar_lea.vmem %s0, %s439
        $region72: #{deco_forward.1} parent=67 // pred_fallthru
          _
        // Predicated region
        $region73: #{deco_forward.1} parent=67 // pred_check
          %p441 = pneg %p70
        $region74: #{deco_forward.1} parent=67 // pred_check_branch
          %443 = sbr.rel (%p441) target = $region76
        $region75: #{deco_forward.1} parent=67 // pred_region
          %p444 = scmp.lt.s32.totalorder %s24, 1
          %s445 = scalar_select %p444, %s24, 1
          %s446 = smul.addr %s445, 6
          %s447 = smul.addr %s446, 8
          %s448 = scalar_lea.vmem %s1, %s447
        $region76: #{deco_forward.1} parent=67 // pred_fallthru
          _
      $region68: #{deco_forward.1} parent=5 // pred_fallthru
        _
      %p449 = scmp.le.s32.totalorder 1, %s24
      %p450 = scmp.lt.s32.totalorder %s24, 3
      %p451 = pnand %p449, %p450
      %p452 = pneg %p451
      // Predicated region
      $region77: #{deco_forward.1} parent=5 // pred_check
        _
      $region78: #{deco_forward.1} parent=5 // pred_check_branch
        %454 = sbr.rel (%p451) target = $region80
      $region79: #{deco_forward.1} parent=5 // pred_region
        %s455 = ssub.s32 %s24, 1
        %p456 = scmp.lt.s32.totalorder %s29, 1
        %s457 = scalar_select %p456, %s29, 1
        %s458 = smul.addr %s457, 4
        %s459 = smul.addr %s458, 4
        %s460 = scalar_lea.vmem %s0, %s459
        %p461 = pneg %p50
        %p462 = pneg %p47
        %p463 = scmp.lt.s32.totalorder %s29, 1
        %s464 = scalar_select %p463, %s29, 1
        %s465 = smul.addr %s464, 6
        %s466 = smul.addr %s465, 8
        %s467 = scalar_lea.vmem %s1, %s466
        %p468 = pneg %p76
        %p469 = pneg %p73
        %p470 = pneg %p97
        %p471 = pneg %p94
        %p472 = pneg %p118
        %p473 = pneg %p115
        %p474 = pneg %p139
        %p475 = pneg %p136
        %p476 = pneg %p160
        %p477 = pneg %p157
        %p478 = pneg %p181
        %p479 = pneg %p178
        %p480 = pneg %p202
        %p481 = pneg %p199
        %p482 = pneg %p223
        %p483 = pneg %p220
        %p484 = pneg %p244
        %p485 = pneg %p241
        %p486 = pneg %p265
        %p487 = pneg %p262
        %p488 = pneg %p286
        %p489 = pneg %p283
        %p490 = pneg %p307
        %p491 = pneg %p304
        %p492 = pneg %p328
        %p493 = pneg %p325
        %p494 = pneg %p349
        %p495 = pneg %p346
        %p496 = pneg %p375
        %p497 = pneg %p372
        %s498 = sand.u32 %s362, 1
        %s499 = scalar_lea.sflag [#allocation9], %s498
        %s500 = sand.u32 %s362, 1
        %s501 = smul.addr %s500, 48
        %s502 = scalar_lea.vmem [#allocation8], %s501
        %p503 = scmp.lt.s32.totalorder %s29, 1
        %s504 = scalar_select %p503, %s29, 1
        %s505 = smul.addr %s504, 4
        %s506 = smul.addr %s505, 4
        %s507 = scalar_lea.vmem %s0, %s506
        %p508 = scmp.lt.s32.totalorder %s29, 1
        %s509 = scalar_select %p508, %s29, 1
        %s510 = smul.addr %s509, 6
        %s511 = smul.addr %s510, 8
        %s512 = scalar_lea.vmem %s1, %s511
        %v513 = vld [vmem:[%s507] sm:$0x7]
        %vm514 = vcmask 632832
        %515 = vst.msk [vmem:[#allocation2] sm:$0x7] %vm514, %v513
        %s516 = scalar_lea.vmem %s507, 4
        %v517 = vld [vmem:[%s516] sm:$0x7]
        %518 = vst.msk [vmem:[#allocation2 + $0x3] sm:$0x7] %vm514, %v517
        %v519 = vld [vmem:[%s507] sm:$0x7]
        %521 = vrot.lane.b32.xlu0 %v519, 127
        %v522 = vpop.permute.xlu0 %521
        %524 = vst.msk [vmem:[#allocation2 + $0x6] sm:$0x7] %vm514, %v522
        %v525 = vld [vmem:[%s516] sm:$0x7]
        %527 = vrot.lane.b32.xlu0 %v525, 127
        %v528 = vpop.permute.xlu0 %527
        %530 = vst.msk [vmem:[#allocation2 + $0x9] sm:$0x7] %vm514, %v528
        %v531 = vld [vmem:[%s507] sm:$0x7]
        %533 = vrot.lane.b32.xlu0 %v531, 126
        %v534 = vpop.permute.xlu0 %533
        %536 = vst.msk [vmem:[#allocation2 + $0xc] sm:$0x7] %vm514, %v534
        %s537 = scalar_lea.vmem %s507, 8
        %v538 = vld [vmem:[%s537] sm:$0x7]
        %539 = vst.msk [vmem:[#allocation2 + $0xf] sm:$0x7] %vm514, %v538
        %s540 = scalar_lea.vmem %s507, 12
        %v541 = vld [vmem:[%s540] sm:$0x7]
        %542 = vst.msk [vmem:[#allocation2 + $0x12] sm:$0x7] %vm514, %v541
        %v543 = vld [vmem:[%s537] sm:$0x7]
        %545 = vrot.lane.b32.xlu0 %v543, 127
        %v546 = vpop.permute.xlu0 %545
        %548 = vst.msk [vmem:[#allocation2 + $0x15] sm:$0x7] %vm514, %v546
        %v549 = vld [vmem:[%s540] sm:$0x7]
        %551 = vrot.lane.b32.xlu0 %v549, 127
        %v552 = vpop.permute.xlu0 %551
        %554 = vst.msk [vmem:[#allocation2 + $0x18] sm:$0x7] %vm514, %v552
        %v555 = vld [vmem:[%s537] sm:$0x7]
        %557 = vrot.lane.b32.xlu0 %v555, 126
        %v558 = vpop.permute.xlu0 %557
        %560 = vst.msk [vmem:[#allocation2 + $0x1b] sm:$0x7] %vm514, %v558
        %v561 = vld [vmem:[%s507] sm:$0x7]
        %563 = vrot.lane.b32.xlu0 %v561, 118
        %v564 = vpop.permute.xlu0 %563
        %566 = vst.msk [vmem:[#allocation2 + $0x1e] sm:$0x7] %vm514, %v564
        %v567 = vld [vmem:[%s516] sm:$0x7]
        %569 = vrot.lane.b32.xlu0 %v567, 118
        %v570 = vpop.permute.xlu0 %569
        %572 = vst.msk [vmem:[#allocation2 + $0x21] sm:$0x7] %vm514, %v570
        %v573 = vld [vmem:[%s507] sm:$0x7]
        %575 = vrot.lane.b32.xlu0 %v573, 117
        %v576 = vpop.permute.xlu0 %575
        %578 = vst.msk [vmem:[#allocation2 + $0x24] sm:$0x7] %vm514, %v576
        %v579 = vld [vmem:[%s516] sm:$0x7]
        %581 = vrot.lane.b32.xlu0 %v579, 117
        %v582 = vpop.permute.xlu0 %581
        %584 = vst.msk [vmem:[#allocation2 + $0x27] sm:$0x7] %vm514, %v582
        %v585 = vld [vmem:[%s507] sm:$0x7]
        %587 = vrot.lane.b32.xlu0 %v585, 116
        %v588 = vpop.permute.xlu0 %587
        %590 = vst.msk [vmem:[#allocation2 + $0x2a] sm:$0x7] %vm514, %v588
        %v591 = vld [vmem:[%s537] sm:$0x7]
        %593 = vrot.lane.b32.xlu0 %v591, 118
        %v594 = vpop.permute.xlu0 %593
        %596 = vst.msk [vmem:[#allocation2 + $0x2d] sm:$0x7] %vm514, %v594
        %v597 = vld [vmem:[%s540] sm:$0x7]
        %599 = vrot.lane.b32.xlu0 %v597, 118
        %v600 = vpop.permute.xlu0 %599
        %602 = vst.msk [vmem:[#allocation2 + $0x30] sm:$0x7] %vm514, %v600
        %v603 = vld [vmem:[%s537] sm:$0x7]
        %605 = vrot.lane.b32.xlu0 %v603, 117
        %v606 = vpop.permute.xlu0 %605
        %608 = vst.msk [vmem:[#allocation2 + $0x33] sm:$0x7] %vm514, %v606
        %v609 = vld [vmem:[%s540] sm:$0x7]
        %611 = vrot.lane.b32.xlu0 %v609, 117
        %v612 = vpop.permute.xlu0 %611
        %614 = vst.msk [vmem:[#allocation2 + $0x36] sm:$0x7] %vm514, %v612
        %v615 = vld [vmem:[%s537] sm:$0x7]
        %617 = vrot.lane.b32.xlu0 %v615, 116
        %v618 = vpop.permute.xlu0 %617
        %620 = vst.msk [vmem:[#allocation2 + $0x39] sm:$0x7] %vm514, %v618
        %v621 = vld [vmem:[%s507] sm:$0x7]
        %623 = vrot.lane.b32.xlu0 %v621, 108
        %v624 = vpop.permute.xlu0 %623
        %626 = vst.msk [vmem:[#allocation2 + $0x3c] sm:$0x7] %vm514, %v624
        %v627 = vld [vmem:[%s516] sm:$0x7]
        %629 = vrot.lane.b32.xlu0 %v627, 108
        %v630 = vpop.permute.xlu0 %629
        %632 = vst.msk [vmem:[#allocation2 + $0x3f] sm:$0x7] %vm514, %v630
        %v633 = vld [vmem:[%s507] sm:$0x7]
        %635 = vrot.lane.b32.xlu0 %v633, 107
        %v636 = vpop.permute.xlu0 %635
        %638 = vst.msk [vmem:[#allocation2 + $0x42] sm:$0x7] %vm514, %v636
        %v639 = vld [vmem:[%s516] sm:$0x7]
        %641 = vrot.lane.b32.xlu0 %v639, 107
        %v642 = vpop.permute.xlu0 %641
        %644 = vst.msk [vmem:[#allocation2 + $0x45] sm:$0x7] %vm514, %v642
        %v645 = vld [vmem:[%s507] sm:$0x7]
        %647 = vrot.lane.b32.xlu0 %v645, 106
        %v648 = vpop.permute.xlu0 %647
        %650 = vst.msk [vmem:[#allocation2 + $0x48] sm:$0x7] %vm514, %v648
        %v651 = vld [vmem:[%s2] sm:$0xff]
        %v652 = vld [vmem:[#allocation2] sm:$0xff]
        %v653 = vld [vmem:[#allocation2 + $0x8] sm:$0xff]
        %v654 = vld [vmem:[#allocation2 + $0x10] sm:$0xff]
        %v655 = vld [vmem:[#allocation2 + $0x18] sm:$0xff]
        %v656 = vld [vmem:[#allocation2 + $0x20] sm:$0xff]
        %v657 = vld [vmem:[#allocation2 + $0x28] sm:$0xff]
        %v658 = vld [vmem:[#allocation2 + $0x30] sm:$0xff]
        %v659 = vld [vmem:[#allocation2 + $0x38] sm:$0xff]
        %v660 = vld [vmem:[#allocation2 + $0x40] sm:$0xff]
        %v661 = vld [vmem:[#allocation2 + $0x48] sm:$0x7]
        %v662 = vld [vmem:[%s3] sm:$0xff]
        %664 = vset.pattern.permute.xlu0 0
        %665 = vperm.xlu0 %664, %v662
        %v666 = vpop.permute.xlu0 %665
        %vm668 = vcmask 613376
        %v670 = vsel %vm668, %v651, 0
        %vm672 = vcmask 1042432
        %v674 = vsel %vm672, %v661, 0
        %676 = vmatpush.msra.mxu0 0.0
        %677 = vmatpush.msra.mxu0 0.0
        %678 = vmatpush.msra.mxu0 0.0
        %679 = vmatpush.msra.mxu0 0.0
        %680 = vmatpush.msra.mxu0 0.0
        %681 = vmatpush.msra.mxu0 0.0
        %682 = vmatpush.msra.mxu0 %v674
        %683 = vmatpush.msra.mxu0 %v660
        %684 = vmatpush.msra.mxu0 %v659
        %685 = vmatpush.msra.mxu0 %v658
        %686 = vmatpush.msra.mxu0 %v657
        %687 = vmatpush.msra.mxu0 %v656
        %688 = vmatpush.msra.mxu0 %v655
        %689 = vmatpush.msra.mxu0 %v654
        %690 = vmatpush.msra.mxu0 %v653
        %691 = vmatpush.msra.mxu0 %v652
        %692 = vmatmul.f32.gmra.mxu0 %v670
        %v693 = vpop.f32.mrf.mxu0
        %v694 = vadd.f32 %v666, %v693
        %695 = vdwg.mxu0
        %v696 = vmax.f32 %v694, 0.0
        %vm697 = vcmask 818176
        %698 = vst.msk [vmem:[#allocation3] sm:$0xff] %vm697, 0.0
        %v699 = vld [vmem:[%s5] sm:$0x1]
        %v701 = vperm.slane %v699, 0
        %v703 = vmul.f32 %v696, %v701
        %705 = vrot.lane.b32.xlu0 %v703, 11
        %v706 = vpop.permute.xlu0 %705
        %vm708 = vcmask 728152
        %709 = vst.msk [vmem:[#allocation3] sm:$0xff] %vm708, %v706
        %vm710 = vcmask 293888
        %711 = vst.msk [vmem:[#allocation4] sm:$0xff] %vm710, 0.0
        %v712 = vld [vmem:[#allocation3] sm:$0xff]
        %714 = vrot.lane.b32.xlu0 %v712, 118
        %v715 = vpop.permute.xlu0 %714
        %v717 = vmax.f32 %v712, %v715
        %718 = vrot.lane.b32.xlu0 %v712, 108
        %v719 = vpop.permute.xlu0 %718
        %v721 = vmax.f32 %v717, %v719
        %723 = vrot.lane.b32.xlu0 %v721, 127
        %v724 = vpop.permute.xlu0 %723
        %v726 = vmax.f32 %v721, %v724
        %727 = vrot.lane.b32.xlu0 %v721, 126
        %v728 = vpop.permute.xlu0 %727
        %v730 = vmax.f32 %v726, %v728
        %v731 = vld [vmem:[%s4] sm:$0xff]
        %vm732 = vcmask 64512
        %v734 = vsel %vm732, %v730, 0
        %736 = vmatpush.msra.mxu0 0.0
        %737 = vmatpush.msra.mxu0 0.0
        %738 = vmatpush.msra.mxu0 0.0
        %739 = vmatpush.msra.mxu0 0.0
        %740 = vmatpush.msra.mxu0 0.0
        %741 = vmatpush.msra.mxu0 0.0
        %742 = vmatpush.msra.mxu0 0.0
        %743 = vmatpush.msra.mxu0 0.0
        %744 = vmatpush.msra.mxu0 0.0
        %745 = vmatpush.msra.mxu0 0.0
        %746 = vmatpush.msra.mxu0 0.0
        %747 = vmatpush.msra.mxu0 0.0
        %748 = vmatpush.msra.mxu0 0.0
        %749 = vmatpush.msra.mxu0 0.0
        %750 = vmatpush.msra.mxu0 0.0
        %751 = vmatpush.msra.mxu0 %v731
        %752 = vmatmul.f32.gmra.mxu0 %v734
        %v753 = vpop.f32.mrf.mxu0
        %v754 = vadd.f32 0.0, %v753
        %755 = vdwg.mxu0
        %757 = vrot.lane.b32.xlu0 %v754, 7
        %v758 = vpop.permute.xlu0 %757
        %vm760 = vcmask 89144
        %761 = vst.msk [vmem:[#allocation4] sm:$0xff] %vm760, %v758
        %v762 = vld [vmem:[#allocation3] sm:$0xff]
        %764 = vrot.lane.b32.xlu0 %v762, 118
        %v765 = vpop.permute.xlu0 %764
        %v767 = vmax.f32 %v762, %v765
        %768 = vrot.lane.b32.xlu0 %v762, 108
        %v769 = vpop.permute.xlu0 %768
        %v771 = vmax.f32 %v767, %v769
        %773 = vrot.lane.b32.xlu0 %v771, 127
        %v774 = vpop.permute.xlu0 %773
        %v776 = vmax.f32 %v771, %v774
        %777 = vrot.lane.b32.xlu0 %v771, 126
        %v778 = vpop.permute.xlu0 %777
        %v780 = vmax.f32 %v776, %v778
        %v781 = vld [vmem:[%s4] sm:$0xff]
        %783 = vrot.lane.b32.xlu0 %v780, 108
        %v784 = vpop.permute.xlu0 %783
        %v785 = vsel %vm732, %v784, 0
        %787 = vmatpush.msra.mxu0 0.0
        %788 = vmatpush.msra.mxu0 0.0
        %789 = vmatpush.msra.mxu0 0.0
        %790 = vmatpush.msra.mxu0 0.0
        %791 = vmatpush.msra.mxu0 0.0
        %792 = vmatpush.msra.mxu0 0.0
        %793 = vmatpush.msra.mxu0 0.0
        %794 = vmatpush.msra.mxu0 0.0
        %795 = vmatpush.msra.mxu0 0.0
        %796 = vmatpush.msra.mxu0 0.0
        %797 = vmatpush.msra.mxu0 0.0
        %798 = vmatpush.msra.mxu0 0.0
        %799 = vmatpush.msra.mxu0 0.0
        %800 = vmatpush.msra.mxu0 0.0
        %801 = vmatpush.msra.mxu0 0.0
        %802 = vmatpush.msra.mxu0 %v781
        %803 = vmatmul.f32.gmra.mxu0 %v785
        %v804 = vpop.f32.mrf.mxu0
        %v805 = vadd.f32 0.0, %v804
        %806 = vdwg.mxu0
        %808 = vrot.lane.b32.xlu0 %v805, 13
        %v809 = vpop.permute.xlu0 %808
        %vm811 = vcmask 138344
        %812 = vst.msk [vmem:[#allocation4] sm:$0xff] %vm811, %v809
        %v813 = vld [vmem:[#allocation3] sm:$0xff]
        %815 = vrot.lane.b32.xlu0 %v813, 118
        %v816 = vpop.permute.xlu0 %815
        %v818 = vmax.f32 %v813, %v816
        %819 = vrot.lane.b32.xlu0 %v813, 108
        %v820 = vpop.permute.xlu0 %819
        %v822 = vmax.f32 %v818, %v820
        %824 = vrot.lane.b32.xlu0 %v822, 127
        %v825 = vpop.permute.xlu0 %824
        %v827 = vmax.f32 %v822, %v825
        %828 = vrot.lane.b32.xlu0 %v822, 126
        %v829 = vpop.permute.xlu0 %828
        %v831 = vmax.f32 %v827, %v829
        %v832 = vld [vmem:[%s4] sm:$0xff]
        %834 = vrot.lane.b32.xlu0 %v831, 88
        %v835 = vpop.permute.xlu0 %834
        %v836 = vsel %vm732, %v835, 0
        %838 = vmatpush.msra.mxu0 0.0
        %839 = vmatpush.msra.mxu0 0.0
        %840 = vmatpush.msra.mxu0 0.0
        %841 = vmatpush.msra.mxu0 0.0
        %842 = vmatpush.msra.mxu0 0.0
        %843 = vmatpush.msra.mxu0 0.0
        %844 = vmatpush.msra.mxu0 0.0
        %845 = vmatpush.msra.mxu0 0.0
        %846 = vmatpush.msra.mxu0 0.0
        %847 = vmatpush.msra.mxu0 0.0
        %848 = vmatpush.msra.mxu0 0.0
        %849 = vmatpush.msra.mxu0 0.0
        %850 = vmatpush.msra.mxu0 0.0
        %851 = vmatpush.msra.mxu0 0.0
        %852 = vmatpush.msra.mxu0 0.0
        %853 = vmatpush.msra.mxu0 %v832
        %854 = vmatmul.f32.gmra.mxu0 %v836
        %v855 = vpop.f32.mrf.mxu0
        %v856 = vadd.f32 0.0, %v855
        %857 = vdwg.mxu0
        %859 = vrot.lane.b32.xlu0 %v856, 19
        %v860 = vpop.permute.xlu0 %859
        %vm862 = vcmask 187544
        %863 = vst.msk [vmem:[#allocation4] sm:$0xff] %vm862, %v860
        %v864 = vld [vmem:[#allocation3] sm:$0xff]
        %866 = vrot.lane.b32.xlu0 %v864, 118
        %v867 = vpop.permute.xlu0 %866
        %v869 = vmax.f32 %v864, %v867
        %870 = vrot.lane.b32.xlu0 %v864, 108
        %v871 = vpop.permute.xlu0 %870
        %v873 = vmax.f32 %v869, %v871
        %875 = vrot.lane.b32.xlu0 %v873, 127
        %v876 = vpop.permute.xlu0 %875
        %v878 = vmax.f32 %v873, %v876
        %879 = vrot.lane.b32.xlu0 %v873, 126
        %v880 = vpop.permute.xlu0 %879
        %v882 = vmax.f32 %v878, %v880
        %v883 = vld [vmem:[%s4] sm:$0xff]
        %885 = vrot.lane.b32.xlu0 %v882, 68
        %v886 = vpop.permute.xlu0 %885
        %v887 = vsel %vm732, %v886, 0
        %889 = vmatpush.msra.mxu0 0.0
        %890 = vmatpush.msra.mxu0 0.0
        %891 = vmatpush.msra.mxu0 0.0
        %892 = vmatpush.msra.mxu0 0.0
        %893 = vmatpush.msra.mxu0 0.0
        %894 = vmatpush.msra.mxu0 0.0
        %895 = vmatpush.msra.mxu0 0.0
        %896 = vmatpush.msra.mxu0 0.0
        %897 = vmatpush.msra.mxu0 0.0
        %898 = vmatpush.msra.mxu0 0.0
        %899 = vmatpush.msra.mxu0 0.0
        %900 = vmatpush.msra.mxu0 0.0
        %901 = vmatpush.msra.mxu0 0.0
        %902 = vmatpush.msra.mxu0 0.0
        %903 = vmatpush.msra.mxu0 0.0
        %904 = vmatpush.msra.mxu0 %v883
        %905 = vmatmul.f32.gmra.mxu0 %v887
        %v906 = vpop.f32.mrf.mxu0
        %v907 = vadd.f32 0.0, %v906
        %908 = vdwg.mxu0
        %910 = vrot.lane.b32.xlu0 %v907, 25
        %v911 = vpop.permute.xlu0 %910
        %vm913 = vcmask 236744
        %914 = vst.msk [vmem:[#allocation4] sm:$0xff] %vm913, %v911
        %v915 = vld [vmem:[%s10] sm:$0x1]
        %v916 = vld [vmem:[#allocation4] sm:$0xff]
        %vm917 = vcmask 179200
        %918 = vst.msk [vmem:[#allocation6] sm:$0xff] %vm917, %v916
        %v919 = vld [vmem:[#allocation4] sm:$0xff]
        %921 = vrot.lane.b32.xlu0 %v919, 127
        %v922 = vpop.permute.xlu0 %921
        %924 = vst.msk [vmem:[#allocation6 + $0x8] sm:$0xff] %vm917, %v922
        %v925 = vld [vmem:[#allocation4] sm:$0xff]
        %927 = vrot.lane.b32.xlu0 %v925, 126
        %v928 = vpop.permute.xlu0 %927
        %930 = vst.msk [vmem:[#allocation6 + $0x10] sm:$0xff] %vm917, %v928
        %v931 = vld [vmem:[#allocation4] sm:$0xff]
        %933 = vrot.lane.b32.xlu0 %v931, 122
        %v934 = vpop.permute.xlu0 %933
        %936 = vst.msk [vmem:[#allocation6 + $0x18] sm:$0xff] %vm917, %v934
        %v937 = vld [vmem:[#allocation4] sm:$0xff]
        %939 = vrot.lane.b32.xlu0 %v937, 121
        %v940 = vpop.permute.xlu0 %939
        %942 = vst.msk [vmem:[#allocation6 + $0x20] sm:$0xff] %vm917, %v940
        %v943 = vld [vmem:[#allocation4] sm:$0xff]
        %945 = vrot.lane.b32.xlu0 %v943, 120
        %v946 = vpop.permute.xlu0 %945
        %948 = vst.msk [vmem:[#allocation6 + $0x28] sm:$0xff] %vm917, %v946
        %v949 = vld [vmem:[#allocation4] sm:$0xff]
        %951 = vrot.lane.b32.xlu0 %v949, 116
        %v952 = vpop.permute.xlu0 %951
        %954 = vst.msk [vmem:[#allocation6 + $0x30] sm:$0xff] %vm917, %v952
        %v955 = vld [vmem:[#allocation4] sm:$0xff]
        %957 = vrot.lane.b32.xlu0 %v955, 115
        %v958 = vpop.permute.xlu0 %957
        %960 = vst.msk [vmem:[#allocation6 + $0x38] sm:$0xff] %vm917, %v958
        %v961 = vld [vmem:[#allocation4] sm:$0xff]
        %963 = vrot.lane.b32.xlu0 %v961, 114
        %v964 = vpop.permute.xlu0 %963
        %966 = vst.msk [vmem:[#allocation6 + $0x40] sm:$0xff] %vm917, %v964
        %v967 = vld [vmem:[%s6] sm:$0xff]
        %v968 = vld [vmem:[#allocation6] sm:$0xff]
        %v969 = vld [vmem:[#allocation6 + $0x8] sm:$0xff]
        %v970 = vld [vmem:[#allocation6 + $0x10] sm:$0xff]
        %v971 = vld [vmem:[#allocation6 + $0x18] sm:$0xff]
        %v972 = vld [vmem:[#allocation6 + $0x20] sm:$0xff]
        %v973 = vld [vmem:[#allocation6 + $0x28] sm:$0xff]
        %v974 = vld [vmem:[#allocation6 + $0x30] sm:$0xff]
        %v975 = vld [vmem:[#allocation6 + $0x38] sm:$0xff]
        %v976 = vld [vmem:[#allocation6 + $0x40] sm:$0xff]
        %v977 = vld [vmem:[%s7] sm:$0xff]
        %979 = vset.pattern.permute.xlu0 0
        %980 = vperm.xlu0 %979, %v977
        %v981 = vpop.permute.xlu0 %980
        %vm983 = vcmask 588800
        %v985 = vsel %vm983, %v967, 0
        %987 = vmatpush.msra.mxu0 0.0
        %988 = vmatpush.msra.mxu0 0.0
        %989 = vmatpush.msra.mxu0 0.0
        %990 = vmatpush.msra.mxu0 0.0
        %991 = vmatpush.msra.mxu0 0.0
        %992 = vmatpush.msra.mxu0 0.0
        %993 = vmatpush.msra.mxu0 0.0
        %994 = vmatpush.msra.mxu0 %v976
        %995 = vmatpush.msra.mxu0 %v975
        %996 = vmatpush.msra.mxu0 %v974
        %997 = vmatpush.msra.mxu0 %v973
        %998 = vmatpush.msra.mxu0 %v972
        %999 = vmatpush.msra.mxu0 %v971
        %1000 = vmatpush.msra.mxu0 %v970
        %1001 = vmatpush.msra.mxu0 %v969
        %1002 = vmatpush.msra.mxu0 %v968
        %1003 = vmatmul.f32.gmra.mxu0 %v985
        %v1004 = vpop.f32.mrf.mxu0
        %v1005 = vadd.f32 %v981, %v1004
        %1006 = vdwg.mxu0
        %v1007 = vmax.f32 %v1005, 0.0
        %1008 = vst.msk [vmem:[#allocation5] sm:$0xff] %vm710, 0.0
        %v1010 = vperm.slane %v915, 0
        %v1012 = vmul.f32 %v1007, %v1010
        %1014 = vrot.lane.b32.xlu0 %v1012, 7
        %v1015 = vpop.permute.xlu0 %1014
        %vm1017 = vcmask 236600
        %1018 = vst.msk [vmem:[#allocation5] sm:$0xff] %vm1017, %v1015
        %v1019 = vld [vmem:[#allocation5] sm:$0xff]
        %1020 = vst.msk [vmem:[#allocation6] sm:$0xff] %vm917, %v1019
        %v1021 = vld [vmem:[#allocation5] sm:$0xff]
        %1023 = vrot.lane.b32.xlu0 %v1021, 127
        %v1024 = vpop.permute.xlu0 %1023
        %1026 = vst.msk [vmem:[#allocation6 + $0x8] sm:$0xff] %vm917, %v1024
        %v1027 = vld [vmem:[#allocation5] sm:$0xff]
        %1029 = vrot.lane.b32.xlu0 %v1027, 126
        %v1030 = vpop.permute.xlu0 %1029
        %1032 = vst.msk [vmem:[#allocation6 + $0x10] sm:$0xff] %vm917, %v1030
        %v1033 = vld [vmem:[#allocation5] sm:$0xff]
        %1035 = vrot.lane.b32.xlu0 %v1033, 122
        %v1036 = vpop.permute.xlu0 %1035
        %1038 = vst.msk [vmem:[#allocation6 + $0x18] sm:$0xff] %vm917, %v1036
        %v1039 = vld [vmem:[#allocation5] sm:$0xff]
        %1041 = vrot.lane.b32.xlu0 %v1039, 121
        %v1042 = vpop.permute.xlu0 %1041
        %1044 = vst.msk [vmem:[#allocation6 + $0x20] sm:$0xff] %vm917, %v1042
        %v1045 = vld [vmem:[#allocation5] sm:$0xff]
        %1047 = vrot.lane.b32.xlu0 %v1045, 120
        %v1048 = vpop.permute.xlu0 %1047
        %1050 = vst.msk [vmem:[#allocation6 + $0x28] sm:$0xff] %vm917, %v1048
        %v1051 = vld [vmem:[#allocation5] sm:$0xff]
        %1053 = vrot.lane.b32.xlu0 %v1051, 116
        %v1054 = vpop.permute.xlu0 %1053
        %1056 = vst.msk [vmem:[#allocation6 + $0x30] sm:$0xff] %vm917, %v1054
        %v1057 = vld [vmem:[#allocation5] sm:$0xff]
        %1059 = vrot.lane.b32.xlu0 %v1057, 115
        %v1060 = vpop.permute.xlu0 %1059
        %1062 = vst.msk [vmem:[#allocation6 + $0x38] sm:$0xff] %vm917, %v1060
        %v1063 = vld [vmem:[#allocation5] sm:$0xff]
        %1065 = vrot.lane.b32.xlu0 %v1063, 114
        %v1066 = vpop.permute.xlu0 %1065
        %1068 = vst.msk [vmem:[#allocation6 + $0x40] sm:$0xff] %vm917, %v1066
        %v1069 = vld [vmem:[%s8] sm:$0xff]
        %v1070 = vld [vmem:[#allocation6] sm:$0xff]
        %v1071 = vld [vmem:[#allocation6 + $0x8] sm:$0xff]
        %v1072 = vld [vmem:[#allocation6 + $0x10] sm:$0xff]
        %v1073 = vld [vmem:[#allocation6 + $0x18] sm:$0xff]
        %v1074 = vld [vmem:[#allocation6 + $0x20] sm:$0xff]
        %v1075 = vld [vmem:[#allocation6 + $0x28] sm:$0xff]
        %v1076 = vld [vmem:[#allocation6 + $0x30] sm:$0xff]
        %v1077 = vld [vmem:[#allocation6 + $0x38] sm:$0xff]
        %v1078 = vld [vmem:[#allocation6 + $0x40] sm:$0xff]
        %v1079 = vld [vmem:[%s9] sm:$0xff]
        %1081 = vset.pattern.permute.xlu0 0
        %1082 = vperm.xlu0 %1081, %v1079
        %v1083 = vpop.permute.xlu0 %1082
        %v1086 = vsel %vm983, %v1069, 0
        %1088 = vmatpush.msra.mxu0 0.0
        %1089 = vmatpush.msra.mxu0 0.0
        %1090 = vmatpush.msra.mxu0 0.0
        %1091 = vmatpush.msra.mxu0 0.0
        %1092 = vmatpush.msra.mxu0 0.0
        %1093 = vmatpush.msra.mxu0 0.0
        %1094 = vmatpush.msra.mxu0 0.0
        %1095 = vmatpush.msra.mxu0 %v1078
        %1096 = vmatpush.msra.mxu0 %v1077
        %1097 = vmatpush.msra.mxu0 %v1076
        %1098 = vmatpush.msra.mxu0 %v1075
        %1099 = vmatpush.msra.mxu0 %v1074
        %1100 = vmatpush.msra.mxu0 %v1073
        %1101 = vmatpush.msra.mxu0 %v1072
        %1102 = vmatpush.msra.mxu0 %v1071
        %1103 = vmatpush.msra.mxu0 %v1070
        %1104 = vmatmul.f32.gmra.mxu0 %v1086
        %v1105 = vpop.f32.mrf.mxu0
        %v1106 = vadd.f32 %v1083, %v1105
        %1107 = vdwg.mxu0
        %1109 = vrot.lane.b32.xlu0 %v916, 121
        %v1110 = vpop.permute.xlu0 %1109
        %v1112 = vadd.f32 %v1106, %v1110
        %v1113 = vmax.f32 %v1112, 0.0
        %v1114 = vld [vmem:[%s11] sm:$0x7]
        %v1115 = vld [vmem:[%s12] sm:$0x7]
        %1117 = vset.pattern.permute.xlu0 0
        %1118 = vperm.xlu0 %1117, %v1115
        %v1119 = vpop.permute.xlu0 %1118
        %v1122 = vsel %vm732, %v1114, 0
        %1124 = vmatpush.msra.mxu0 0.0
        %1125 = vmatpush.msra.mxu0 0.0
        %1126 = vmatpush.msra.mxu0 0.0
        %1127 = vmatpush.msra.mxu0 0.0
        %1128 = vmatpush.msra.mxu0 0.0
        %1129 = vmatpush.msra.mxu0 0.0
        %1130 = vmatpush.msra.mxu0 0.0
        %1131 = vmatpush.msra.mxu0 0.0
        %1132 = vmatpush.msra.mxu0 0.0
        %1133 = vmatpush.msra.mxu0 0.0
        %1134 = vmatpush.msra.mxu0 0.0
        %1135 = vmatpush.msra.mxu0 0.0
        %1136 = vmatpush.msra.mxu0 0.0
        %1137 = vmatpush.msra.mxu0 0.0
        %1138 = vmatpush.msra.mxu0 0.0
        %1139 = vmatpush.msra.mxu0 %v1113
        %1140 = vmatmul.f32.gmra.mxu0 %v1122
        %v1141 = vpop.f32.mrf.mxu0
        %v1142 = vadd.f32 %v1119, %v1141
        %1143 = vdwg.mxu0
        %v1145 = vrot.slane %v1142, 1
        %v1146 = vrot.slane %v1142, 2
        %vm1149 = vcmask 24576
        %1150 = vst.msk [vmem:[#allocation7] sm:$0x1] %vm1149, %v1142
        %1151 = vst.msk [vmem:[#allocation7 + $0x4] sm:$0x1] %vm1149, %v1145
        %1152 = vst.msk [vmem:[#allocation7 + $0x8] sm:$0x1] %vm1149, %v1146
        %v1153 = vperm.slane %v1142, 0
        %v1154 = vperm.slane %v1145, 0
        %v1155 = vperm.slane %v1146, 0
        %1156 = vrot.lane.b32.xlu0 %v1153, 122
        %v1157 = vpop.permute.xlu0 %1156
        %1158 = vrot.lane.b32.xlu0 %v1154, 122
        %v1159 = vpop.permute.xlu0 %1158
        %1160 = vrot.lane.b32.xlu0 %v1155, 122
        %v1161 = vpop.permute.xlu0 %1160
        %1165 = vst.msk [vmem:[#allocation7 + $0x1] sm:$0x1] %vm1149, %v1157
        %1166 = vst.msk [vmem:[#allocation7 + $0x5] sm:$0x1] %vm1149, %v1159
        %1167 = vst.msk [vmem:[#allocation7 + $0x9] sm:$0x1] %vm1149, %v1161
        %1168 = vrot.lane.b32.xlu0 %v1153, 116
        %v1169 = vpop.permute.xlu0 %1168
        %1170 = vrot.lane.b32.xlu0 %v1154, 116
        %v1171 = vpop.permute.xlu0 %1170
        %1172 = vrot.lane.b32.xlu0 %v1155, 116
        %v1173 = vpop.permute.xlu0 %1172
        %1177 = vst.msk [vmem:[#allocation7 + $0x2] sm:$0x1] %vm1149, %v1169
        %1178 = vst.msk [vmem:[#allocation7 + $0x6] sm:$0x1] %vm1149, %v1171
        %1179 = vst.msk [vmem:[#allocation7 + $0xa] sm:$0x1] %vm1149, %v1173
        %1180 = vrot.lane.b32.xlu0 %v1153, 110
        %v1181 = vpop.permute.xlu0 %1180
        %1182 = vrot.lane.b32.xlu0 %v1154, 110
        %v1183 = vpop.permute.xlu0 %1182
        %1184 = vrot.lane.b32.xlu0 %v1155, 110
        %v1185 = vpop.permute.xlu0 %1184
        %1189 = vst.msk [vmem:[#allocation7 + $0x3] sm:$0x1] %vm1149, %v1181
        %1190 = vst.msk [vmem:[#allocation7 + $0x7] sm:$0x1] %vm1149, %v1183
        %1191 = vst.msk [vmem:[#allocation7 + $0xb] sm:$0x1] %vm1149, %v1185
        %v1192 = vld [vmem:[%s13] sm:$0xff]
        %v1193 = vld [vmem:[%s13 + $0x8] sm:$0xff]
        %v1194 = vld [vmem:[%s14] sm:$0xf]
        %v1195 = vld [vmem:[#allocation7] sm:$0xf]
        %vm1196 = vcmask 31744
        %v1198 = vsel %vm1196, %v1192, 0
        %v1201 = vsel %vm1196, %v1193, 0
        %vm1203 = vcmask 1043456
        %v1205 = vsel %vm1203, %v1195, 0
        %1207 = vmatpush.msra.mxu0 0.0
        %1208 = vmatpush.msra.mxu0 0.0
        %1209 = vmatpush.msra.mxu0 0.0
        %1210 = vmatpush.msra.mxu0 0.0
        %1211 = vmatpush.msra.mxu0 0.0
        %1212 = vmatpush.msra.mxu0 0.0
        %1213 = vmatpush.msra.mxu0 0.0
        %1214 = vmatpush.msra.mxu0 0.0
        %1215 = vmatpush.msra.mxu0 0.0
        %1216 = vmatpush.msra.mxu0 0.0
        %1217 = vmatpush.msra.mxu0 0.0
        %1218 = vmatpush.msra.mxu0 0.0
        %1219 = vmatpush.msra.mxu0 0.0
        %1220 = vmatpush.msra.mxu0 0.0
        %1221 = vmatpush.msra.mxu0 0.0
        %1222 = vmatpush.msra.mxu0 %v1205
        %1223 = vmatmul.f32.gmra.mxu0 %v1198
        %v1224 = vpop.f32.mrf.mxu0
        %v1225 = vadd.f32 0.0, %v1224
        %1226 = vmatmul.f32.gmra.mxu0 %v1201
        %v1227 = vpop.f32.mrf.mxu0
        %v1228 = vadd.f32 0.0, %v1227
        %1229 = vdwg.mxu0
        %v1230 = vld [vmem:[%s512] sm:$0xff]
        %v1231 = vld [vmem:[%s512 + $0x8] sm:$0xff]
        %v1233 = vsel %vm1196, %v1225, 0
        %v1236 = vsel %vm1196, %v1228, 0
        %v1239 = vsel %vm1203, %v1194, 0
        %1241 = vmatpush.msra.mxu0 0.0
        %1242 = vmatpush.msra.mxu0 0.0
        %1243 = vmatpush.msra.mxu0 0.0
        %1244 = vmatpush.msra.mxu0 0.0
        %1245 = vmatpush.msra.mxu0 0.0
        %1246 = vmatpush.msra.mxu0 0.0
        %1247 = vmatpush.msra.mxu0 0.0
        %1248 = vmatpush.msra.mxu0 0.0
        %1249 = vmatpush.msra.mxu0 0.0
        %1250 = vmatpush.msra.mxu0 0.0
        %1251 = vmatpush.msra.mxu0 0.0
        %1252 = vmatpush.msra.mxu0 0.0
        %1253 = vmatpush.msra.mxu0 0.0
        %1254 = vmatpush.msra.mxu0 0.0
        %1255 = vmatpush.msra.mxu0 0.0
        %1256 = vmatpush.msra.mxu0 %v1239
        %1257 = vmatmul.f32.gmra.mxu0 %v1233
        %v1258 = vpop.f32.mrf.mxu0
        %v1259 = vadd.f32 %v1230, %v1258
        %1260 = vmatmul.f32.gmra.mxu0 %v1236
        %v1261 = vpop.f32.mrf.mxu0
        %v1262 = vadd.f32 %v1231, %v1261
        %1263 = vdwg.mxu0
        %vm1264 = vcmask 130048
        %1265 = vst.msk [vmem:[%s502] sm:$0xff] %vm1264, %v1259
        %1266 = vst.msk [vmem:[%s502 + $0x8] sm:$0xff] %vm1264, %v1262
        %s1267 = scalar_lea.vmem [#allocation7], 4
        %v1268 = vld [vmem:[%s1267] sm:$0xf]
        %v1270 = vsel %vm1203, %v1268, 0
        %1272 = vmatpush.msra.mxu0 0.0
        %1273 = vmatpush.msra.mxu0 0.0
        %1274 = vmatpush.msra.mxu0 0.0
        %1275 = vmatpush.msra.mxu0 0.0
        %1276 = vmatpush.msra.mxu0 0.0
        %1277 = vmatpush.msra.mxu0 0.0
        %1278 = vmatpush.msra.mxu0 0.0
        %1279 = vmatpush.msra.mxu0 0.0
        %1280 = vmatpush.msra.mxu0 0.0
        %1281 = vmatpush.msra.mxu0 0.0
        %1282 = vmatpush.msra.mxu0 0.0
        %1283 = vmatpush.msra.mxu0 0.0
        %1284 = vmatpush.msra.mxu0 0.0
        %1285 = vmatpush.msra.mxu0 0.0
        %1286 = vmatpush.msra.mxu0 0.0
        %1287 = vmatpush.msra.mxu0 %v1270
        %1288 = vmatmul.f32.gmra.mxu0 %v1198
        %v1289 = vpop.f32.mrf.mxu0
        %v1290 = vadd.f32 0.0, %v1289
        %1291 = vmatmul.f32.gmra.mxu0 %v1201
        %v1292 = vpop.f32.mrf.mxu0
        %v1293 = vadd.f32 0.0, %v1292
        %1294 = vdwg.mxu0
        %s1295 = scalar_lea.vmem %s512, 16
        %v1296 = vld [vmem:[%s1295] sm:$0xff]
        %v1297 = vld [vmem:[%s1295 + $0x8] sm:$0xff]
        %v1299 = vsel %vm1196, %v1290, 0
        %v1302 = vsel %vm1196, %v1293, 0
        %1304 = vmatpush.msra.mxu0 0.0
        %1305 = vmatpush.msra.mxu0 0.0
        %1306 = vmatpush.msra.mxu0 0.0
        %1307 = vmatpush.msra.mxu0 0.0
        %1308 = vmatpush.msra.mxu0 0.0
        %1309 = vmatpush.msra.mxu0 0.0
        %1310 = vmatpush.msra.mxu0 0.0
        %1311 = vmatpush.msra.mxu0 0.0
        %1312 = vmatpush.msra.mxu0 0.0
        %1313 = vmatpush.msra.mxu0 0.0
        %1314 = vmatpush.msra.mxu0 0.0
        %1315 = vmatpush.msra.mxu0 0.0
        %1316 = vmatpush.msra.mxu0 0.0
        %1317 = vmatpush.msra.mxu0 0.0
        %1318 = vmatpush.msra.mxu0 0.0
        %1319 = vmatpush.msra.mxu0 %v1239
        %1320 = vmatmul.f32.gmra.mxu0 %v1299
        %v1321 = vpop.f32.mrf.mxu0
        %v1322 = vadd.f32 %v1296, %v1321
        %1323 = vmatmul.f32.gmra.mxu0 %v1302
        %v1324 = vpop.f32.mrf.mxu0
        %v1325 = vadd.f32 %v1297, %v1324
        %1326 = vdwg.mxu0
        %s1327 = scalar_lea.vmem %s502, 16 [#allocation8]
        %1328 = vst.msk [vmem:[%s1327] sm:$0xff] %vm1264, %v1322
        %1329 = vst.msk [vmem:[%s1327 + $0x8] sm:$0xff] %vm1264, %v1325
        %s1330 = scalar_lea.vmem [#allocation7], 8
        %v1331 = vld [vmem:[%s1330] sm:$0xf]
        %v1333 = vsel %vm1203, %v1331, 0
        %1335 = vmatpush.msra.mxu0 0.0
        %1336 = vmatpush.msra.mxu0 0.0
        %1337 = vmatpush.msra.mxu0 0.0
        %1338 = vmatpush.msra.mxu0 0.0
        %1339 = vmatpush.msra.mxu0 0.0
        %1340 = vmatpush.msra.mxu0 0.0
        %1341 = vmatpush.msra.mxu0 0.0
        %1342 = vmatpush.msra.mxu0 0.0
        %1343 = vmatpush.msra.mxu0 0.0
        %1344 = vmatpush.msra.mxu0 0.0
        %1345 = vmatpush.msra.mxu0 0.0
        %1346 = vmatpush.msra.mxu0 0.0
        %1347 = vmatpush.msra.mxu0 0.0
        %1348 = vmatpush.msra.mxu0 0.0
        %1349 = vmatpush.msra.mxu0 0.0
        %1350 = vmatpush.msra.mxu0 %v1333
        %1351 = vmatmul.f32.gmra.mxu0 %v1198
        %v1352 = vpop.f32.mrf.mxu0
        %v1353 = vadd.f32 0.0, %v1352
        %1354 = vmatmul.f32.gmra.mxu0 %v1201
        %v1355 = vpop.f32.mrf.mxu0
        %v1356 = vadd.f32 0.0, %v1355
        %1357 = vdwg.mxu0
        %s1358 = scalar_lea.vmem %s512, 32
        %v1359 = vld [vmem:[%s1358] sm:$0xff]
        %v1360 = vld [vmem:[%s1358 + $0x8] sm:$0xff]
        %v1362 = vsel %vm1196, %v1353, 0
        %v1365 = vsel %vm1196, %v1356, 0
        %1367 = vmatpush.msra.mxu0 0.0
        %1368 = vmatpush.msra.mxu0 0.0
        %1369 = vmatpush.msra.mxu0 0.0
        %1370 = vmatpush.msra.mxu0 0.0
        %1371 = vmatpush.msra.mxu0 0.0
        %1372 = vmatpush.msra.mxu0 0.0
        %1373 = vmatpush.msra.mxu0 0.0
        %1374 = vmatpush.msra.mxu0 0.0
        %1375 = vmatpush.msra.mxu0 0.0
        %1376 = vmatpush.msra.mxu0 0.0
        %1377 = vmatpush.msra.mxu0 0.0
        %1378 = vmatpush.msra.mxu0 0.0
        %1379 = vmatpush.msra.mxu0 0.0
        %1380 = vmatpush.msra.mxu0 0.0
        %1381 = vmatpush.msra.mxu0 0.0
        %1382 = vmatpush.msra.mxu0 %v1239
        %1383 = vmatmul.f32.gmra.mxu0 %v1362
        %v1384 = vpop.f32.mrf.mxu0
        %v1385 = vadd.f32 %v1359, %v1384
        %1386 = vmatmul.f32.gmra.mxu0 %v1365
        %v1387 = vpop.f32.mrf.mxu0
        %v1388 = vadd.f32 %v1360, %v1387
        %1389 = vdwg.mxu0
        %s1390 = scalar_lea.vmem %s502, 32 [#allocation8]
        %1391 = vst.msk [vmem:[%s1390] sm:$0xff] %vm1264, %v1385
        %1392 = vst.msk [vmem:[%s1390 + $0x8] sm:$0xff] %vm1264, %v1388
        %s1393 = sand.u32 %s362, 1
        %s1394 = scalar_lea.sflag [#allocation9], %s1393
        %s1395 = sand.u32 %s362, 1
        %s1396 = smul.addr %s1395, 48
        %s1397 = scalar_lea.vmem [#allocation8], %s1396
        // Predicated region
        $region81: #{deco_forward.1} parent=79 // pred_check
          %p1398 = pneg %p372
        $region82: #{deco_forward.1} parent=79 // pred_check_branch
          %1400 = sbr.rel (%p1398) target = $region84
        $region83: #{deco_forward.1} parent=79 // pred_region
          %1402 = vsyncadd %s1394, 0
          %s1403 = smul.addr %s29, 6
          %s1404 = smul.addr %s1403, 8
          %s1405 = scalar_lea.hbm %s15, %s1404
          %s1406 = sshll.u32 %s1397, 4
          %s1407 = int_to_ptr.vmem [resolvable:$true] %s1406
          %s1408 = sshll.u32 %s1405, 4
          %s1409 = int_to_ptr.hbm [resolvable:$true] %s1408
          %1414 = dma.vmem_to_hbm [thread:$0]  %s1407, 768, %s1409, %s1394, 128, 128, 8
        $region84: #{deco_forward.1} parent=79 // pred_fallthru
          _
      $region80: #{deco_forward.1} parent=5 // pred_fallthru
        _
      %p1415 = scmp.le.s32.totalorder 2, %s24
      // Predicated region
      $region85: #{deco_forward.1} parent=5 // pred_check
        %p1416 = pneg %p1415
      $region86: #{deco_forward.1} parent=5 // pred_check_branch
        %1418 = sbr.rel (%p1416) target = $region88
      $region87: #{deco_forward.1} parent=5 // pred_region
        %s1419 = ssub.s32 %s24, 2
        // Predicated region
        $region89: #{deco_forward.1} parent=87 // pred_check
          %p1420 = pneg %p378
        $region90: #{deco_forward.1} parent=87 // pred_check_branch
          %1422 = sbr.rel (%p1420) target = $region92
        $region91: #{deco_forward.1} parent=87 // pred_region
          %s1423 = sand.u32 %s363, 1
          %s1424 = scalar_lea.sflag [#allocation9], %s1423
          %s1425 = sand.u32 %s363, 1
          %s1426 = smul.addr %s1425, 48
          %s1427 = scalar_lea.vmem [#allocation8], %s1426
          %1429 = dma.done %s1424, 768
        $region92: #{deco_forward.1} parent=87 // pred_fallthru
          _
      $region88: #{deco_forward.1} parent=5 // pred_fallthru
        _
    $region6: #{deco_forward.1} parent=1 // loop_footer
      %s28 = sadd.s32 1, %s24
    $region7: #{deco_forward.1} parent=1 // loop_footer_branch
      %23 = sbr.rel target = $region3
    $region8: #{deco_forward.1} parent=1 // loop_exit
      _
    %1430 = vsyncpa [#allocation9], 1
    %s1431 = scalar_lea.sflag [#allocation9], 1
    %1432 = vsyncpa %s1431, 1

</llo_original>
